<compile_context>
chip_gen: v7x
topology: tpu7x:2x2x1
jax: 0.10.0
libtpu: 0.0.40
codegen_flags: <defaults>
</compile_context>

<pallas_src>
import math

import jax
import jax.numpy as jnp
import numpy as np
from jax.experimental import pallas as pl
from jax.experimental.pallas import tpu as pltpu


def _gru_kernel(T_actual):
    """Build the kernel body; T_actual is baked in for tail masking."""

    def kernel(xg_ref, h0_ref, whh_ref, out_ref, hlast_ref, h_scratch):
        # xg_ref   : (Tc, Bt, 3H) bf16  precomputed x_t @ W_ih^T + (b_ih + b_hh)
        # h0_ref   : (Bt, H)            initial hidden state
        # whh_ref  : (H, 3H)  f32       recurrent weights (resident in VMEM)
        # out_ref  : (Tc, Bt, H)        per-step hidden states for this chunk
        # hlast_ref: (Bt, H)            final hidden state
        # h_scratch: (Bt, H)  f32       hidden-state carry across time chunks
        c = pl.program_id(1)                     # time-chunk index (serial)
        tc = xg_ref.shape[0]
        H = hlast_ref.shape[-1]

        @pl.when(c == 0)
        def _():
            h_scratch[...] = h0_ref[...].astype(jnp.float32)

        w = whh_ref[...]                         # (H, 3H) f32, stays resident

        def step(i, h):
            t = c * tc + i                       # global timestep
            xg = xg_ref[i].astype(jnp.float32)   # (Bt, 3H)
            gates = xg + jnp.dot(h, w, preferred_element_type=jnp.float32)
            pre_r = gates[:, 0 * H:1 * H]
            pre_z = gates[:, 1 * H:2 * H]
            pre_n = gates[:, 2 * H:3 * H]
            # sigmoid via single tanh (one EUP op on the r critical path)
            r = 0.5 * (jnp.tanh(0.5 * pre_r) + 1.0)
            z = 0.5 * (jnp.tanh(0.5 * pre_z) + 1.0)
            n = jnp.tanh(r * pre_n)              # custom cell: tanh(r * n_pre)
            hy = h + z * (n - h)                 # == (1-z)*h + z*n
            out_ref[i] = hy.astype(out_ref.dtype)
            # Padded tail steps must not advance the carried hidden state.
            return jnp.where(t < T_actual, hy, h)

        h = jax.lax.fori_loop(0, tc, step, h_scratch[...], unroll=8)
        h_scratch[...] = h
        # Block is VMEM-resident (constant index over the time axis): writing
        # every chunk is free and avoids flushing uninitialized memory.
        hlast_ref[...] = h.astype(hlast_ref.dtype)

    return kernel


def _pick_chunk(T, max_chunk):
    """Timesteps per grid step and padded T (multiple of the chunk)."""
    tc = min(max_chunk, T)
    T_pad = ((T + tc - 1) // tc) * tc
    return tc, T_pad


def _pick_batch_tile(B):
    """Split the batch tile for the v7x two-core 'parallel' axis when legal."""
    if B >= 16 and B % 16 == 0:
        return B // 2          # multiple of 8, grid[0] == 2
    return B


def custom_gru(x, w_ih, w_hh, b_ih, b_hh, h0=None, *, max_chunk=32):
    """x: (B, T, D); w_ih: (3H, D); w_hh: (3H, H); biases: (3H,).
    Returns (output (B, T, H), h_last (B, H)) — CustomGRU with batch_first."""
    B, T, D = x.shape
    H = w_hh.shape[1]
    dtype = x.dtype

    if h0 is None:
        h0 = jnp.zeros((B, H), dtype=dtype)

    # --- Bulk input projection (off the serial critical path). -------------
    # One (B*T, D) @ (D, 3H) matmul, emitted time-major so there is no HBM
    # transpose of x.  f32 matmul, then stored bf16 to halve the streamed DMA.
    wih_t = jnp.transpose(w_ih).astype(jnp.float32)              # (D, 3H)
    bias = (b_ih + b_hh).astype(jnp.float32)                     # (3H,)
    x_gates = (jnp.einsum('btd,dg->tbg',
                          x.astype(jnp.float32), wih_t,
                          preferred_element_type=jnp.float32)
               + bias).astype(jnp.bfloat16)                      # (T, B, 3H)

    whh_t = jnp.transpose(w_hh).astype(jnp.float32)              # (H, 3H)

    tc, T_pad = _pick_chunk(T, max_chunk)
    if T_pad != T:
        x_gates = jnp.pad(x_gates, ((0, T_pad - T), (0, 0), (0, 0)))
    bt = _pick_batch_tile(B)
    grid = (B // bt, T_pad // tc)

    # --- VMEM budget derived from the actual block sizes. ------------------
    out_bytes = jnp.dtype(dtype).itemsize
    xg_blk = tc * bt * 3 * H * 2                 # bf16 input chunk
    out_blk = tc * bt * H * out_bytes
    whh_b = H * 3 * H * 4
    h0_b = bt * H * jnp.dtype(dtype).itemsize
    hl_b = bt * H * out_bytes
    scr_b = bt * H * 4
    need = 2 * (xg_blk + out_blk + h0_b + whh_b + hl_b) + scr_b
    vmem_limit = int(min(max(need * 3 // 2, 16 * 2**20), 100 * 2**20))

    out_tbh, h_last = pl.pallas_call(
        _gru_kernel(T),
        out_shape=(
            jax.ShapeDtypeStruct((T_pad, B, H), dtype),
            jax.ShapeDtypeStruct((B, H), dtype),
        ),
        grid_spec=pltpu.PrefetchScalarGridSpec(
            num_scalar_prefetch=0,
            grid=grid,
            in_specs=[
                pl.BlockSpec((tc, bt, 3 * H), lambda b, c: (c, b, 0)),  # x_gates
                pl.BlockSpec((bt, H), lambda b, c: (b, 0)),             # h0
                pl.BlockSpec((H, 3 * H), lambda b, c: (0, 0)),          # W_hh^T
            ],
            out_specs=[
                pl.BlockSpec((tc, bt, H), lambda b, c: (c, b, 0)),      # outputs
                pl.BlockSpec((bt, H), lambda b, c: (b, 0)),             # h_last
            ],
            scratch_shapes=[pltpu.VMEM((bt, H), jnp.float32)],
        ),
        compiler_params=pltpu.CompilerParams(
            # batch axis is embarrassingly parallel; time axis is a recurrence
            dimension_semantics=("parallel", "arbitrary"),
            vmem_limit_bytes=vmem_limit,
        ),
    )(x_gates, h0, whh_t)

    # batch_first contract: (B, T, H); drop the padded tail steps.
    output = jnp.transpose(out_tbh[:T], (1, 0, 2))
    return output, h_last


def _gru_reference(x, w_ih, w_hh, b_ih, b_hh, h0):
    """Pure-JAX f32 reference matching the PyTorch forward exactly."""
    def cell(h, xt):
        gates = (jnp.dot(xt, w_ih.T, precision=jax.lax.Precision.HIGHEST)
                 + b_ih
                 + jnp.dot(h, w_hh.T, precision=jax.lax.Precision.HIGHEST)
                 + b_hh)
        H = h.shape[-1]
        r = jax.nn.sigmoid(gates[:, :H])
        z = jax.nn.sigmoid(gates[:, H:2 * H])
        n = jnp.tanh(r * gates[:, 2 * H:])
        hy = (1.0 - z) * h + z * n
        return hy, hy

    h_last, outs = jax.lax.scan(cell, h0, jnp.transpose(x, (1, 0, 2)))
    return jnp.transpose(outs, (1, 0, 2)), h_last


def _xavier_uniform(key, shape, dtype=jnp.float32):
    fan_out, fan_in = shape
    a = math.sqrt(6.0 / (fan_in + fan_out))
    return jax.random.uniform(key, shape, dtype=dtype, minval=-a, maxval=a)


if __name__ == "__main__":
    # Small, lane-friendly shapes consistent with the module (D = H = 128).
    # T=20 with max_chunk=8 exercises both the padded tail and multi-chunk
    # carry; B=16 exercises the two-tile parallel batch axis.
    B, T, D, H = 16, 20, 128, 128

    key = jax.random.PRNGKey(0)
    k_x, k_ih, k_hh = jax.random.split(key, 3)

    x = jax.random.normal(k_x, (B, T, D), dtype=jnp.float32)

    # Deterministic parameter init matching nn.init in the module.
    w_ih = _xavier_uniform(k_ih, (3 * H, D))
    w_hh = _xavier_uniform(k_hh, (3 * H, H))
    b_ih = jnp.zeros((3 * H,), dtype=jnp.float32)
    b_hh = jnp.zeros((3 * H,), dtype=jnp.float32)

    out, h_last = custom_gru(x, w_ih, w_hh, b_ih, b_hh, max_chunk=8)
    jax.block_until_ready((out, h_last))

    ref_out, ref_h = _gru_reference(x, w_ih, w_hh, b_ih, b_hh,
                                    jnp.zeros((B, H), jnp.float32))
    # bf16-stored x_gates + default-precision f32 matmuls -> modest tolerance.
    np.testing.assert_allclose(np.asarray(out), np.asarray(ref_out),
                               rtol=2e-2, atol=2e-2)
    np.testing.assert_allclose(np.asarray(h_last), np.asarray(ref_h),
                               rtol=2e-2, atol=2e-2)

    print("KERNEL_OK")
</pallas_src>

<mosaic_0001>
module attributes {stable_mosaic.version = 11 : i64} {
  func.func @kernel(%arg0: i32, %arg1: i32, %arg2: memref<8x8x384xbf16, #tpu.memory_space<vmem>>, %arg3: memref<8x128xf32, #tpu.memory_space<vmem>>, %arg4: memref<128x384xf32, #tpu.memory_space<vmem>>, %arg5: memref<8x8x128xf32, #tpu.memory_space<vmem>>, %arg6: memref<8x128xf32, #tpu.memory_space<vmem>>, %arg7: memref<8x128xf32, #tpu.memory_space<vmem>>) attributes {dimension_semantics = [#tpu.dimension_semantics<parallel>, #tpu.dimension_semantics<arbitrary>], iteration_bounds = array<i64: 2, 3>, scalar_prefetch = 0 : i64, scratch_operands = 1 : i64, tpu.core_type = #tpu.core_type<tc>, window_params = [{transform_indices = @transform_0, window_bounds = array<i64: 8, 8, 384>}, {transform_indices = @transform_1, window_bounds = array<i64: 8, 128>}, {pipeline_mode = #tpu.pipeline_mode<synchronous>, transform_indices = @transform_2, window_bounds = array<i64: 128, 384>}, {transform_indices = @transform_3, window_bounds = array<i64: 8, 8, 128>}, {transform_indices = @transform_4, window_bounds = array<i64: 8, 128>}]} {
    %c0_i32 = arith.constant 0 : i32
    %0 = arith.cmpi eq, %arg1, %c0_i32 : i32
    %1 = arith.extui %0 : i1 to i32
    %c0_i32_0 = arith.constant 0 : i32
    %2 = arith.cmpi ne, %1, %c0_i32_0 : i32
    scf.if %2 {
      %c0_111 = arith.constant 0 : index
      %c0_112 = arith.constant 0 : index
      %295 = vector.load %arg3[%c0_111, %c0_112] : memref<8x128xf32, #tpu.memory_space<vmem>>, vector<8x128xf32>
      %c0_113 = arith.constant 0 : index
      %c0_114 = arith.constant 0 : index
      %296 = vector.load %arg7[%c0_113, %c0_114] : memref<8x128xf32, #tpu.memory_space<vmem>>, vector<8x128xf32>
      tpu.vector_store %arg7[%c0_113, %c0_114], %295 {strides = array<i32>} : memref<8x128xf32, #tpu.memory_space<vmem>>, vector<8x128xf32>,
    } else {
    }
    %c0 = arith.constant 0 : index
    %c0_1 = arith.constant 0 : index
    %3 = vector.load %arg4[%c0, %c0_1] : memref<128x384xf32, #tpu.memory_space<vmem>>, vector<128x384xf32>
    %c0_2 = arith.constant 0 : index
    %c0_3 = arith.constant 0 : index
    %4 = vector.load %arg7[%c0_2, %c0_3] : memref<8x128xf32, #tpu.memory_space<vmem>>, vector<8x128xf32>
    %c0_i32_4 = arith.constant 0 : i32
    %c8_i32 = arith.constant 8 : i32
    %5 = arith.muli %arg1, %c8_i32 : i32
    %6 = arith.addi %5, %c0_i32_4 : i32
    %7 = arith.index_cast %c0_i32_4 : i32 to index
    %c0_5 = arith.constant 0 : index
    %c0_6 = arith.constant 0 : index
    %8 = vector.load %arg2[%7, %c0_5, %c0_6] : memref<8x8x384xbf16, #tpu.memory_space<vmem>>, vector<1x8x384xbf16>
    %9 = vector.shape_cast %8 : vector<1x8x384xbf16> to vector<8x384xbf16>
    %10 = arith.extf %9 : vector<8x384xbf16> to vector<8x384xf32>
    %cst = arith.constant dense<0.000000e+00> : vector<8x384xf32>
    %11 = tpu.matmul %4, %3, %cst {dimension_numbers = #tpu.dot_dimension_numbers<[1], [0], [0], [1], [0, 0, 1, 1], [], []>} : vector<8x128xf32>, vector<128x384xf32>, vector<8x384xf32> -> vector<8x384xf32>
    %12 = arith.addf %10, %11 : vector<8x384xf32>
    %13 = vector.extract_strided_slice %12 {offsets = [0, 0], sizes = [8, 128], strides = [1, 1]} : vector<8x384xf32> to vector<8x128xf32>
    %14 = vector.extract_strided_slice %12 {offsets = [0, 128], sizes = [8, 128], strides = [1, 1]} : vector<8x384xf32> to vector<8x128xf32>
    %15 = vector.extract_strided_slice %12 {offsets = [0, 256], sizes = [8, 128], strides = [1, 1]} : vector<8x384xf32> to vector<8x128xf32>
    %cst_7 = arith.constant 5.000000e-01 : f32
    %16 = vector.broadcast %cst_7 : f32 to vector<8x128xf32>
    %17 = arith.mulf %16, %13 : vector<8x128xf32>
    %18 = math.tanh %17 : vector<8x128xf32>
    %cst_8 = arith.constant 1.000000e+00 : f32
    %19 = vector.broadcast %cst_8 : f32 to vector<8x128xf32>
    %20 = arith.addf %18, %19 : vector<8x128xf32>
    %cst_9 = arith.constant 5.000000e-01 : f32
    %21 = vector.broadcast %cst_9 : f32 to vector<8x128xf32>
    %22 = arith.mulf %21, %20 : vector<8x128xf32>
    %cst_10 = arith.constant 5.000000e-01 : f32
    %23 = vector.broadcast %cst_10 : f32 to vector<8x128xf32>
    %24 = arith.mulf %23, %14 : vector<8x128xf32>
    %25 = math.tanh %24 : vector<8x128xf32>
    %cst_11 = arith.constant 1.000000e+00 : f32
    %26 = vector.broadcast %cst_11 : f32 to vector<8x128xf32>
    %27 = arith.addf %25, %26 : vector<8x128xf32>
    %cst_12 = arith.constant 5.000000e-01 : f32
    %28 = vector.broadcast %cst_12 : f32 to vector<8x128xf32>
    %29 = arith.mulf %28, %27 : vector<8x128xf32>
    %30 = arith.mulf %22, %15 : vector<8x128xf32>
    %31 = math.tanh %30 : vector<8x128xf32>
    %32 = arith.subf %31, %4 : vector<8x128xf32>
    %33 = arith.mulf %29, %32 : vector<8x128xf32>
    %34 = arith.addf %4, %33 : vector<8x128xf32>
    %35 = arith.index_cast %c0_i32_4 : i32 to index
    %c0_13 = arith.constant 0 : index
    %c0_14 = arith.constant 0 : index
    %36 = vector.load %arg5[%35, %c0_13, %c0_14] : memref<8x8x128xf32, #tpu.memory_space<vmem>>, vector<1x8x128xf32>
    %37 = vector.shape_cast %36 : vector<1x8x128xf32> to vector<8x128xf32>
    %38 = vector.shape_cast %34 : vector<8x128xf32> to vector<1x8x128xf32>
    tpu.vector_store %arg5[%35, %c0_13, %c0_14], %38 {strides = array<i32>} : memref<8x8x128xf32, #tpu.memory_space<vmem>>, vector<1x8x128xf32>,
    %c20_i32 = arith.constant 20 : i32
    %39 = arith.cmpi slt, %6, %c20_i32 : i32
    %40 = arith.select %39, %34, %4 : vector<8x128xf32>
    %c1_i32 = arith.constant 1 : i32
    %c8_i32_15 = arith.constant 8 : i32
    %41 = arith.muli %arg1, %c8_i32_15 : i32
    %42 = arith.addi %41, %c1_i32 : i32
    %43 = arith.index_cast %c1_i32 : i32 to index
    %c0_16 = arith.constant 0 : index
    %c0_17 = arith.constant 0 : index
    %44 = vector.load %arg2[%43, %c0_16, %c0_17] : memref<8x8x384xbf16, #tpu.memory_space<vmem>>, vector<1x8x384xbf16>
    %45 = vector.shape_cast %44 : vector<1x8x384xbf16> to vector<8x384xbf16>
    %46 = arith.extf %45 : vector<8x384xbf16> to vector<8x384xf32>
    %cst_18 = arith.constant dense<0.000000e+00> : vector<8x384xf32>
    %47 = tpu.matmul %40, %3, %cst_18 {dimension_numbers = #tpu.dot_dimension_numbers<[1], [0], [0], [1], [0, 0, 1, 1], [], []>} : vector<8x128xf32>, vector<128x384xf32>, vector<8x384xf32> -> vector<8x384xf32>
    %48 = arith.addf %46, %47 : vector<8x384xf32>
    %49 = vector.extract_strided_slice %48 {offsets = [0, 0], sizes = [8, 128], strides = [1, 1]} : vector<8x384xf32> to vector<8x128xf32>
    %50 = vector.extract_strided_slice %48 {offsets = [0, 128], sizes = [8, 128], strides = [1, 1]} : vector<8x384xf32> to vector<8x128xf32>
    %51 = vector.extract_strided_slice %48 {offsets = [0, 256], sizes = [8, 128], strides = [1, 1]} : vector<8x384xf32> to vector<8x128xf32>
    %cst_19 = arith.constant 5.000000e-01 : f32
    %52 = vector.broadcast %cst_19 : f32 to vector<8x128xf32>
    %53 = arith.mulf %52, %49 : vector<8x128xf32>
    %54 = math.tanh %53 : vector<8x128xf32>
    %cst_20 = arith.constant 1.000000e+00 : f32
    %55 = vector.broadcast %cst_20 : f32 to vector<8x128xf32>
    %56 = arith.addf %54, %55 : vector<8x128xf32>
    %cst_21 = arith.constant 5.000000e-01 : f32
    %57 = vector.broadcast %cst_21 : f32 to vector<8x128xf32>
    %58 = arith.mulf %57, %56 : vector<8x128xf32>
    %cst_22 = arith.constant 5.000000e-01 : f32
    %59 = vector.broadcast %cst_22 : f32 to vector<8x128xf32>
    %60 = arith.mulf %59, %50 : vector<8x128xf32>
    %61 = math.tanh %60 : vector<8x128xf32>
    %cst_23 = arith.constant 1.000000e+00 : f32
    %62 = vector.broadcast %cst_23 : f32 to vector<8x128xf32>
    %63 = arith.addf %61, %62 : vector<8x128xf32>
    %cst_24 = arith.constant 5.000000e-01 : f32
    %64 = vector.broadcast %cst_24 : f32 to vector<8x128xf32>
    %65 = arith.mulf %64, %63 : vector<8x128xf32>
    %66 = arith.mulf %58, %51 : vector<8x128xf32>
    %67 = math.tanh %66 : vector<8x128xf32>
    %68 = arith.subf %67, %40 : vector<8x128xf32>
    %69 = arith.mulf %65, %68 : vector<8x128xf32>
    %70 = arith.addf %40, %69 : vector<8x128xf32>
    %71 = arith.index_cast %c1_i32 : i32 to index
    %c0_25 = arith.constant 0 : index
    %c0_26 = arith.constant 0 : index
    %72 = vector.load %arg5[%71, %c0_25, %c0_26] : memref<8x8x128xf32, #tpu.memory_space<vmem>>, vector<1x8x128xf32>
    %73 = vector.shape_cast %72 : vector<1x8x128xf32> to vector<8x128xf32>
    %74 = vector.shape_cast %70 : vector<8x128xf32> to vector<1x8x128xf32>
    tpu.vector_store %arg5[%71, %c0_25, %c0_26], %74 {strides = array<i32>} : memref<8x8x128xf32, #tpu.memory_space<vmem>>, vector<1x8x128xf32>,
    %c20_i32_27 = arith.constant 20 : i32
    %75 = arith.cmpi slt, %42, %c20_i32_27 : i32
    %76 = arith.select %75, %70, %40 : vector<8x128xf32>
    %c2_i32 = arith.constant 2 : i32
    %c8_i32_28 = arith.constant 8 : i32
    %77 = arith.muli %arg1, %c8_i32_28 : i32
    %78 = arith.addi %77, %c2_i32 : i32
    %79 = arith.index_cast %c2_i32 : i32 to index
    %c0_29 = arith.constant 0 : index
    %c0_30 = arith.constant 0 : index
    %80 = vector.load %arg2[%79, %c0_29, %c0_30] : memref<8x8x384xbf16, #tpu.memory_space<vmem>>, vector<1x8x384xbf16>
    %81 = vector.shape_cast %80 : vector<1x8x384xbf16> to vector<8x384xbf16>
    %82 = arith.extf %81 : vector<8x384xbf16> to vector<8x384xf32>
    %cst_31 = arith.constant dense<0.000000e+00> : vector<8x384xf32>
    %83 = tpu.matmul %76, %3, %cst_31 {dimension_numbers = #tpu.dot_dimension_numbers<[1], [0], [0], [1], [0, 0, 1, 1], [], []>} : vector<8x128xf32>, vector<128x384xf32>, vector<8x384xf32> -> vector<8x384xf32>
    %84 = arith.addf %82, %83 : vector<8x384xf32>
    %85 = vector.extract_strided_slice %84 {offsets = [0, 0], sizes = [8, 128], strides = [1, 1]} : vector<8x384xf32> to vector<8x128xf32>
    %86 = vector.extract_strided_slice %84 {offsets = [0, 128], sizes = [8, 128], strides = [1, 1]} : vector<8x384xf32> to vector<8x128xf32>
    %87 = vector.extract_strided_slice %84 {offsets = [0, 256], sizes = [8, 128], strides = [1, 1]} : vector<8x384xf32> to vector<8x128xf32>
    %cst_32 = arith.constant 5.000000e-01 : f32
    %88 = vector.broadcast %cst_32 : f32 to vector<8x128xf32>
    %89 = arith.mulf %88, %85 : vector<8x128xf32>
    %90 = math.tanh %89 : vector<8x128xf32>
    %cst_33 = arith.constant 1.000000e+00 : f32
    %91 = vector.broadcast %cst_33 : f32 to vector<8x128xf32>
    %92 = arith.addf %90, %91 : vector<8x128xf32>
    %cst_34 = arith.constant 5.000000e-01 : f32
    %93 = vector.broadcast %cst_34 : f32 to vector<8x128xf32>
    %94 = arith.mulf %93, %92 : vector<8x128xf32>
    %cst_35 = arith.constant 5.000000e-01 : f32
    %95 = vector.broadcast %cst_35 : f32 to vector<8x128xf32>
    %96 = arith.mulf %95, %86 : vector<8x128xf32>
    %97 = math.tanh %96 : vector<8x128xf32>
    %cst_36 = arith.constant 1.000000e+00 : f32
    %98 = vector.broadcast %cst_36 : f32 to vector<8x128xf32>
    %99 = arith.addf %97, %98 : vector<8x128xf32>
    %cst_37 = arith.constant 5.000000e-01 : f32
    %100 = vector.broadcast %cst_37 : f32 to vector<8x128xf32>
    %101 = arith.mulf %100, %99 : vector<8x128xf32>
    %102 = arith.mulf %94, %87 : vector<8x128xf32>
    %103 = math.tanh %102 : vector<8x128xf32>
    %104 = arith.subf %103, %76 : vector<8x128xf32>
    %105 = arith.mulf %101, %104 : vector<8x128xf32>
    %106 = arith.addf %76, %105 : vector<8x128xf32>
    %107 = arith.index_cast %c2_i32 : i32 to index
    %c0_38 = arith.constant 0 : index
    %c0_39 = arith.constant 0 : index
    %108 = vector.load %arg5[%107, %c0_38, %c0_39] : memref<8x8x128xf32, #tpu.memory_space<vmem>>, vector<1x8x128xf32>
    %109 = vector.shape_cast %108 : vector<1x8x128xf32> to vector<8x128xf32>
    %110 = vector.shape_cast %106 : vector<8x128xf32> to vector<1x8x128xf32>
    tpu.vector_store %arg5[%107, %c0_38, %c0_39], %110 {strides = array<i32>} : memref<8x8x128xf32, #tpu.memory_space<vmem>>, vector<1x8x128xf32>,
    %c20_i32_40 = arith.constant 20 : i32
    %111 = arith.cmpi slt, %78, %c20_i32_40 : i32
    %112 = arith.select %111, %106, %76 : vector<8x128xf32>
    %c3_i32 = arith.constant 3 : i32
    %c8_i32_41 = arith.constant 8 : i32
    %113 = arith.muli %arg1, %c8_i32_41 : i32
    %114 = arith.addi %113, %c3_i32 : i32
    %115 = arith.index_cast %c3_i32 : i32 to index
    %c0_42 = arith.constant 0 : index
    %c0_43 = arith.constant 0 : index
    %116 = vector.load %arg2[%115, %c0_42, %c0_43] : memref<8x8x384xbf16, #tpu.memory_space<vmem>>, vector<1x8x384xbf16>
    %117 = vector.shape_cast %116 : vector<1x8x384xbf16> to vector<8x384xbf16>
    %118 = arith.extf %117 : vector<8x384xbf16> to vector<8x384xf32>
    %cst_44 = arith.constant dense<0.000000e+00> : vector<8x384xf32>
    %119 = tpu.matmul %112, %3, %cst_44 {dimension_numbers = #tpu.dot_dimension_numbers<[1], [0], [0], [1], [0, 0, 1, 1], [], []>} : vector<8x128xf32>, vector<128x384xf32>, vector<8x384xf32> -> vector<8x384xf32>
    %120 = arith.addf %118, %119 : vector<8x384xf32>
    %121 = vector.extract_strided_slice %120 {offsets = [0, 0], sizes = [8, 128], strides = [1, 1]} : vector<8x384xf32> to vector<8x128xf32>
    %122 = vector.extract_strided_slice %120 {offsets = [0, 128], sizes = [8, 128], strides = [1, 1]} : vector<8x384xf32> to vector<8x128xf32>
    %123 = vector.extract_strided_slice %120 {offsets = [0, 256], sizes = [8, 128], strides = [1, 1]} : vector<8x384xf32> to vector<8x128xf32>
    %cst_45 = arith.constant 5.000000e-01 : f32
    %124 = vector.broadcast %cst_45 : f32 to vector<8x128xf32>
    %125 = arith.mulf %124, %121 : vector<8x128xf32>
    %126 = math.tanh %125 : vector<8x128xf32>
    %cst_46 = arith.constant 1.000000e+00 : f32
    %127 = vector.broadcast %cst_46 : f32 to vector<8x128xf32>
    %128 = arith.addf %126, %127 : vector<8x128xf32>
    %cst_47 = arith.constant 5.000000e-01 : f32
    %129 = vector.broadcast %cst_47 : f32 to vector<8x128xf32>
    %130 = arith.mulf %129, %128 : vector<8x128xf32>
    %cst_48 = arith.constant 5.000000e-01 : f32
    %131 = vector.broadcast %cst_48 : f32 to vector<8x128xf32>
    %132 = arith.mulf %131, %122 : vector<8x128xf32>
    %133 = math.tanh %132 : vector<8x128xf32>
    %cst_49 = arith.constant 1.000000e+00 : f32
    %134 = vector.broadcast %cst_49 : f32 to vector<8x128xf32>
    %135 = arith.addf %133, %134 : vector<8x128xf32>
    %cst_50 = arith.constant 5.000000e-01 : f32
    %136 = vector.broadcast %cst_50 : f32 to vector<8x128xf32>
    %137 = arith.mulf %136, %135 : vector<8x128xf32>
    %138 = arith.mulf %130, %123 : vector<8x128xf32>
    %139 = math.tanh %138 : vector<8x128xf32>
    %140 = arith.subf %139, %112 : vector<8x128xf32>
    %141 = arith.mulf %137, %140 : vector<8x128xf32>
    %142 = arith.addf %112, %141 : vector<8x128xf32>
    %143 = arith.index_cast %c3_i32 : i32 to index
    %c0_51 = arith.constant 0 : index
    %c0_52 = arith.constant 0 : index
    %144 = vector.load %arg5[%143, %c0_51, %c0_52] : memref<8x8x128xf32, #tpu.memory_space<vmem>>, vector<1x8x128xf32>
    %145 = vector.shape_cast %144 : vector<1x8x128xf32> to vector<8x128xf32>
    %146 = vector.shape_cast %142 : vector<8x128xf32> to vector<1x8x128xf32>
    tpu.vector_store %arg5[%143, %c0_51, %c0_52], %146 {strides = array<i32>} : memref<8x8x128xf32, #tpu.memory_space<vmem>>, vector<1x8x128xf32>,
    %c20_i32_53 = arith.constant 20 : i32
    %147 = arith.cmpi slt, %114, %c20_i32_53 : i32
    %148 = arith.select %147, %142, %112 : vector<8x128xf32>
    %c4_i32 = arith.constant 4 : i32
    %c8_i32_54 = arith.constant 8 : i32
    %149 = arith.muli %arg1, %c8_i32_54 : i32
    %150 = arith.addi %149, %c4_i32 : i32
    %151 = arith.index_cast %c4_i32 : i32 to index
    %c0_55 = arith.constant 0 : index
    %c0_56 = arith.constant 0 : index
    %152 = vector.load %arg2[%151, %c0_55, %c0_56] : memref<8x8x384xbf16, #tpu.memory_space<vmem>>, vector<1x8x384xbf16>
    %153 = vector.shape_cast %152 : vector<1x8x384xbf16> to vector<8x384xbf16>
    %154 = arith.extf %153 : vector<8x384xbf16> to vector<8x384xf32>
    %cst_57 = arith.constant dense<0.000000e+00> : vector<8x384xf32>
    %155 = tpu.matmul %148, %3, %cst_57 {dimension_numbers = #tpu.dot_dimension_numbers<[1], [0], [0], [1], [0, 0, 1, 1], [], []>} : vector<8x128xf32>, vector<128x384xf32>, vector<8x384xf32> -> vector<8x384xf32>
    %156 = arith.addf %154, %155 : vector<8x384xf32>
    %157 = vector.extract_strided_slice %156 {offsets = [0, 0], sizes = [8, 128], strides = [1, 1]} : vector<8x384xf32> to vector<8x128xf32>
    %158 = vector.extract_strided_slice %156 {offsets = [0, 128], sizes = [8, 128], strides = [1, 1]} : vector<8x384xf32> to vector<8x128xf32>
    %159 = vector.extract_strided_slice %156 {offsets = [0, 256], sizes = [8, 128], strides = [1, 1]} : vector<8x384xf32> to vector<8x128xf32>
    %cst_58 = arith.constant 5.000000e-01 : f32
    %160 = vector.broadcast %cst_58 : f32 to vector<8x128xf32>
    %161 = arith.mulf %160, %157 : vector<8x128xf32>
    %162 = math.tanh %161 : vector<8x128xf32>
    %cst_59 = arith.constant 1.000000e+00 : f32
    %163 = vector.broadcast %cst_59 : f32 to vector<8x128xf32>
    %164 = arith.addf %162, %163 : vector<8x128xf32>
    %cst_60 = arith.constant 5.000000e-01 : f32
    %165 = vector.broadcast %cst_60 : f32 to vector<8x128xf32>
    %166 = arith.mulf %165, %164 : vector<8x128xf32>
    %cst_61 = arith.constant 5.000000e-01 : f32
    %167 = vector.broadcast %cst_61 : f32 to vector<8x128xf32>
    %168 = arith.mulf %167, %158 : vector<8x128xf32>
    %169 = math.tanh %168 : vector<8x128xf32>
    %cst_62 = arith.constant 1.000000e+00 : f32
    %170 = vector.broadcast %cst_62 : f32 to vector<8x128xf32>
    %171 = arith.addf %169, %170 : vector<8x128xf32>
    %cst_63 = arith.constant 5.000000e-01 : f32
    %172 = vector.broadcast %cst_63 : f32 to vector<8x128xf32>
    %173 = arith.mulf %172, %171 : vector<8x128xf32>
    %174 = arith.mulf %166, %159 : vector<8x128xf32>
    %175 = math.tanh %174 : vector<8x128xf32>
    %176 = arith.subf %175, %148 : vector<8x128xf32>
    %177 = arith.mulf %173, %176 : vector<8x128xf32>
    %178 = arith.addf %148, %177 : vector<8x128xf32>
    %179 = arith.index_cast %c4_i32 : i32 to index
    %c0_64 = arith.constant 0 : index
    %c0_65 = arith.constant 0 : index
    %180 = vector.load %arg5[%179, %c0_64, %c0_65] : memref<8x8x128xf32, #tpu.memory_space<vmem>>, vector<1x8x128xf32>
    %181 = vector.shape_cast %180 : vector<1x8x128xf32> to vector<8x128xf32>
    %182 = vector.shape_cast %178 : vector<8x128xf32> to vector<1x8x128xf32>
    tpu.vector_store %arg5[%179, %c0_64, %c0_65], %182 {strides = array<i32>} : memref<8x8x128xf32, #tpu.memory_space<vmem>>, vector<1x8x128xf32>,
    %c20_i32_66 = arith.constant 20 : i32
    %183 = arith.cmpi slt, %150, %c20_i32_66 : i32
    %184 = arith.select %183, %178, %148 : vector<8x128xf32>
    %c5_i32 = arith.constant 5 : i32
    %c8_i32_67 = arith.constant 8 : i32
    %185 = arith.muli %arg1, %c8_i32_67 : i32
    %186 = arith.addi %185, %c5_i32 : i32
    %187 = arith.index_cast %c5_i32 : i32 to index
    %c0_68 = arith.constant 0 : index
    %c0_69 = arith.constant 0 : index
    %188 = vector.load %arg2[%187, %c0_68, %c0_69] : memref<8x8x384xbf16, #tpu.memory_space<vmem>>, vector<1x8x384xbf16>
    %189 = vector.shape_cast %188 : vector<1x8x384xbf16> to vector<8x384xbf16>
    %190 = arith.extf %189 : vector<8x384xbf16> to vector<8x384xf32>
    %cst_70 = arith.constant dense<0.000000e+00> : vector<8x384xf32>
    %191 = tpu.matmul %184, %3, %cst_70 {dimension_numbers = #tpu.dot_dimension_numbers<[1], [0], [0], [1], [0, 0, 1, 1], [], []>} : vector<8x128xf32>, vector<128x384xf32>, vector<8x384xf32> -> vector<8x384xf32>
    %192 = arith.addf %190, %191 : vector<8x384xf32>
    %193 = vector.extract_strided_slice %192 {offsets = [0, 0], sizes = [8, 128], strides = [1, 1]} : vector<8x384xf32> to vector<8x128xf32>
    %194 = vector.extract_strided_slice %192 {offsets = [0, 128], sizes = [8, 128], strides = [1, 1]} : vector<8x384xf32> to vector<8x128xf32>
    %195 = vector.extract_strided_slice %192 {offsets = [0, 256], sizes = [8, 128], strides = [1, 1]} : vector<8x384xf32> to vector<8x128xf32>
    %cst_71 = arith.constant 5.000000e-01 : f32
    %196 = vector.broadcast %cst_71 : f32 to vector<8x128xf32>
    %197 = arith.mulf %196, %193 : vector<8x128xf32>
    %198 = math.tanh %197 : vector<8x128xf32>
    %cst_72 = arith.constant 1.000000e+00 : f32
    %199 = vector.broadcast %cst_72 : f32 to vector<8x128xf32>
    %200 = arith.addf %198, %199 : vector<8x128xf32>
    %cst_73 = arith.constant 5.000000e-01 : f32
    %201 = vector.broadcast %cst_73 : f32 to vector<8x128xf32>
    %202 = arith.mulf %201, %200 : vector<8x128xf32>
    %cst_74 = arith.constant 5.000000e-01 : f32
    %203 = vector.broadcast %cst_74 : f32 to vector<8x128xf32>
    %204 = arith.mulf %203, %194 : vector<8x128xf32>
    %205 = math.tanh %204 : vector<8x128xf32>
    %cst_75 = arith.constant 1.000000e+00 : f32
    %206 = vector.broadcast %cst_75 : f32 to vector<8x128xf32>
    %207 = arith.addf %205, %206 : vector<8x128xf32>
    %cst_76 = arith.constant 5.000000e-01 : f32
    %208 = vector.broadcast %cst_76 : f32 to vector<8x128xf32>
    %209 = arith.mulf %208, %207 : vector<8x128xf32>
    %210 = arith.mulf %202, %195 : vector<8x128xf32>
    %211 = math.tanh %210 : vector<8x128xf32>
    %212 = arith.subf %211, %184 : vector<8x128xf32>
    %213 = arith.mulf %209, %212 : vector<8x128xf32>
    %214 = arith.addf %184, %213 : vector<8x128xf32>
    %215 = arith.index_cast %c5_i32 : i32 to index
    %c0_77 = arith.constant 0 : index
    %c0_78 = arith.constant 0 : index
    %216 = vector.load %arg5[%215, %c0_77, %c0_78] : memref<8x8x128xf32, #tpu.memory_space<vmem>>, vector<1x8x128xf32>
    %217 = vector.shape_cast %216 : vector<1x8x128xf32> to vector<8x128xf32>
    %218 = vector.shape_cast %214 : vector<8x128xf32> to vector<1x8x128xf32>
    tpu.vector_store %arg5[%215, %c0_77, %c0_78], %218 {strides = array<i32>} : memref<8x8x128xf32, #tpu.memory_space<vmem>>, vector<1x8x128xf32>,
    %c20_i32_79 = arith.constant 20 : i32
    %219 = arith.cmpi slt, %186, %c20_i32_79 : i32
    %220 = arith.select %219, %214, %184 : vector<8x128xf32>
    %c6_i32 = arith.constant 6 : i32
    %c8_i32_80 = arith.constant 8 : i32
    %221 = arith.muli %arg1, %c8_i32_80 : i32
    %222 = arith.addi %221, %c6_i32 : i32
    %223 = arith.index_cast %c6_i32 : i32 to index
    %c0_81 = arith.constant 0 : index
    %c0_82 = arith.constant 0 : index
    %224 = vector.load %arg2[%223, %c0_81, %c0_82] : memref<8x8x384xbf16, #tpu.memory_space<vmem>>, vector<1x8x384xbf16>
    %225 = vector.shape_cast %224 : vector<1x8x384xbf16> to vector<8x384xbf16>
    %226 = arith.extf %225 : vector<8x384xbf16> to vector<8x384xf32>
    %cst_83 = arith.constant dense<0.000000e+00> : vector<8x384xf32>
    %227 = tpu.matmul %220, %3, %cst_83 {dimension_numbers = #tpu.dot_dimension_numbers<[1], [0], [0], [1], [0, 0, 1, 1], [], []>} : vector<8x128xf32>, vector<128x384xf32>, vector<8x384xf32> -> vector<8x384xf32>
    %228 = arith.addf %226, %227 : vector<8x384xf32>
    %229 = vector.extract_strided_slice %228 {offsets = [0, 0], sizes = [8, 128], strides = [1, 1]} : vector<8x384xf32> to vector<8x128xf32>
    %230 = vector.extract_strided_slice %228 {offsets = [0, 128], sizes = [8, 128], strides = [1, 1]} : vector<8x384xf32> to vector<8x128xf32>
    %231 = vector.extract_strided_slice %228 {offsets = [0, 256], sizes = [8, 128], strides = [1, 1]} : vector<8x384xf32> to vector<8x128xf32>
    %cst_84 = arith.constant 5.000000e-01 : f32
    %232 = vector.broadcast %cst_84 : f32 to vector<8x128xf32>
    %233 = arith.mulf %232, %229 : vector<8x128xf32>
    %234 = math.tanh %233 : vector<8x128xf32>
    %cst_85 = arith.constant 1.000000e+00 : f32
    %235 = vector.broadcast %cst_85 : f32 to vector<8x128xf32>
    %236 = arith.addf %234, %235 : vector<8x128xf32>
    %cst_86 = arith.constant 5.000000e-01 : f32
    %237 = vector.broadcast %cst_86 : f32 to vector<8x128xf32>
    %238 = arith.mulf %237, %236 : vector<8x128xf32>
    %cst_87 = arith.constant 5.000000e-01 : f32
    %239 = vector.broadcast %cst_87 : f32 to vector<8x128xf32>
    %240 = arith.mulf %239, %230 : vector<8x128xf32>
    %241 = math.tanh %240 : vector<8x128xf32>
    %cst_88 = arith.constant 1.000000e+00 : f32
    %242 = vector.broadcast %cst_88 : f32 to vector<8x128xf32>
    %243 = arith.addf %241, %242 : vector<8x128xf32>
    %cst_89 = arith.constant 5.000000e-01 : f32
    %244 = vector.broadcast %cst_89 : f32 to vector<8x128xf32>
    %245 = arith.mulf %244, %243 : vector<8x128xf32>
    %246 = arith.mulf %238, %231 : vector<8x128xf32>
    %247 = math.tanh %246 : vector<8x128xf32>
    %248 = arith.subf %247, %220 : vector<8x128xf32>
    %249 = arith.mulf %245, %248 : vector<8x128xf32>
    %250 = arith.addf %220, %249 : vector<8x128xf32>
    %251 = arith.index_cast %c6_i32 : i32 to index
    %c0_90 = arith.constant 0 : index
    %c0_91 = arith.constant 0 : index
    %252 = vector.load %arg5[%251, %c0_90, %c0_91] : memref<8x8x128xf32, #tpu.memory_space<vmem>>, vector<1x8x128xf32>
    %253 = vector.shape_cast %252 : vector<1x8x128xf32> to vector<8x128xf32>
    %254 = vector.shape_cast %250 : vector<8x128xf32> to vector<1x8x128xf32>
    tpu.vector_store %arg5[%251, %c0_90, %c0_91], %254 {strides = array<i32>} : memref<8x8x128xf32, #tpu.memory_space<vmem>>, vector<1x8x128xf32>,
    %c20_i32_92 = arith.constant 20 : i32
    %255 = arith.cmpi slt, %222, %c20_i32_92 : i32
    %256 = arith.select %255, %250, %220 : vector<8x128xf32>
    %c7_i32 = arith.constant 7 : i32
    %c8_i32_93 = arith.constant 8 : i32
    %257 = arith.muli %arg1, %c8_i32_93 : i32
    %258 = arith.addi %257, %c7_i32 : i32
    %259 = arith.index_cast %c7_i32 : i32 to index
    %c0_94 = arith.constant 0 : index
    %c0_95 = arith.constant 0 : index
    %260 = vector.load %arg2[%259, %c0_94, %c0_95] : memref<8x8x384xbf16, #tpu.memory_space<vmem>>, vector<1x8x384xbf16>
    %261 = vector.shape_cast %260 : vector<1x8x384xbf16> to vector<8x384xbf16>
    %262 = arith.extf %261 : vector<8x384xbf16> to vector<8x384xf32>
    %cst_96 = arith.constant dense<0.000000e+00> : vector<8x384xf32>
    %263 = tpu.matmul %256, %3, %cst_96 {dimension_numbers = #tpu.dot_dimension_numbers<[1], [0], [0], [1], [0, 0, 1, 1], [], []>} : vector<8x128xf32>, vector<128x384xf32>, vector<8x384xf32> -> vector<8x384xf32>
    %264 = arith.addf %262, %263 : vector<8x384xf32>
    %265 = vector.extract_strided_slice %264 {offsets = [0, 0], sizes = [8, 128], strides = [1, 1]} : vector<8x384xf32> to vector<8x128xf32>
    %266 = vector.extract_strided_slice %264 {offsets = [0, 128], sizes = [8, 128], strides = [1, 1]} : vector<8x384xf32> to vector<8x128xf32>
    %267 = vector.extract_strided_slice %264 {offsets = [0, 256], sizes = [8, 128], strides = [1, 1]} : vector<8x384xf32> to vector<8x128xf32>
    %cst_97 = arith.constant 5.000000e-01 : f32
    %268 = vector.broadcast %cst_97 : f32 to vector<8x128xf32>
    %269 = arith.mulf %268, %265 : vector<8x128xf32>
    %270 = math.tanh %269 : vector<8x128xf32>
    %cst_98 = arith.constant 1.000000e+00 : f32
    %271 = vector.broadcast %cst_98 : f32 to vector<8x128xf32>
    %272 = arith.addf %270, %271 : vector<8x128xf32>
    %cst_99 = arith.constant 5.000000e-01 : f32
    %273 = vector.broadcast %cst_99 : f32 to vector<8x128xf32>
    %274 = arith.mulf %273, %272 : vector<8x128xf32>
    %cst_100 = arith.constant 5.000000e-01 : f32
    %275 = vector.broadcast %cst_100 : f32 to vector<8x128xf32>
    %276 = arith.mulf %275, %266 : vector<8x128xf32>
    %277 = math.tanh %276 : vector<8x128xf32>
    %cst_101 = arith.constant 1.000000e+00 : f32
    %278 = vector.broadcast %cst_101 : f32 to vector<8x128xf32>
    %279 = arith.addf %277, %278 : vector<8x128xf32>
    %cst_102 = arith.constant 5.000000e-01 : f32
    %280 = vector.broadcast %cst_102 : f32 to vector<8x128xf32>
    %281 = arith.mulf %280, %279 : vector<8x128xf32>
    %282 = arith.mulf %274, %267 : vector<8x128xf32>
    %283 = math.tanh %282 : vector<8x128xf32>
    %284 = arith.subf %283, %256 : vector<8x128xf32>
    %285 = arith.mulf %281, %284 : vector<8x128xf32>
    %286 = arith.addf %256, %285 : vector<8x128xf32>
    %287 = arith.index_cast %c7_i32 : i32 to index
    %c0_103 = arith.constant 0 : index
    %c0_104 = arith.constant 0 : index
    %288 = vector.load %arg5[%287, %c0_103, %c0_104] : memref<8x8x128xf32, #tpu.memory_space<vmem>>, vector<1x8x128xf32>
    %289 = vector.shape_cast %288 : vector<1x8x128xf32> to vector<8x128xf32>
    %290 = vector.shape_cast %286 : vector<8x128xf32> to vector<1x8x128xf32>
    tpu.vector_store %arg5[%287, %c0_103, %c0_104], %290 {strides = array<i32>} : memref<8x8x128xf32, #tpu.memory_space<vmem>>, vector<1x8x128xf32>,
    %c20_i32_105 = arith.constant 20 : i32
    %291 = arith.cmpi slt, %258, %c20_i32_105 : i32
    %292 = arith.select %291, %286, %256 : vector<8x128xf32>
    %c8_i32_106 = arith.constant 8 : i32
    %c0_107 = arith.constant 0 : index
    %c0_108 = arith.constant 0 : index
    %293 = vector.load %arg7[%c0_107, %c0_108] : memref<8x128xf32, #tpu.memory_space<vmem>>, vector<8x128xf32>
    tpu.vector_store %arg7[%c0_107, %c0_108], %292 {strides = array<i32>} : memref<8x128xf32, #tpu.memory_space<vmem>>, vector<8x128xf32>,
    %c0_109 = arith.constant 0 : index
    %c0_110 = arith.constant 0 : index
    %294 = vector.load %arg6[%c0_109, %c0_110] : memref<8x128xf32, #tpu.memory_space<vmem>>, vector<8x128xf32>
    tpu.vector_store %arg6[%c0_109, %c0_110], %292 {strides = array<i32>} : memref<8x128xf32, #tpu.memory_space<vmem>>, vector<8x128xf32>,
    return
  }
  func.func @transform_0(%arg0: i32, %arg1: i32) -> (i32, i32, i32) {
    %c0_i32 = arith.constant 0 : i32
    %c0_i32_0 = arith.constant 0 : i32
    return %arg1, %arg0, %c0_i32 : i32, i32, i32
  }
  func.func @transform_1(%arg0: i32, %arg1: i32) -> (i32, i32) {
    %c0_i32 = arith.constant 0 : i32
    %c0_i32_0 = arith.constant 0 : i32
    return %arg0, %c0_i32 : i32, i32
  }
  func.func @transform_2(%arg0: i32, %arg1: i32) -> (i32, i32) {
    %c0_i32 = arith.constant 0 : i32
    %c0_i32_0 = arith.constant 0 : i32
    %c0_i32_1 = arith.constant 0 : i32
    return %c0_i32, %c0_i32_0 : i32, i32
  }
  func.func @transform_3(%arg0: i32, %arg1: i32) -> (i32, i32, i32) {
    %c0_i32 = arith.constant 0 : i32
    %c0_i32_0 = arith.constant 0 : i32
    return %arg1, %arg0, %c0_i32 : i32, i32, i32
  }
  func.func @transform_4(%arg0: i32, %arg1: i32) -> (i32, i32) {
    %c0_i32 = arith.constant 0 : i32
    %c0_i32_0 = arith.constant 0 : i32
    return %arg0, %c0_i32 : i32, i32
  }
}

</mosaic_0001>

<llo_original>
// kernel: tpu_custom_call.1
$region0: #{tpu_custom_call.1}
  #allocation0 [shape = 'u32[]', space=smem, size = 0x4, offset = 0x4, fixed_abs, tag = 'smem constant byte address 0x4 - core index']
  #allocation1 [shape = 'u32[144,128]{1,0:T(1,128)}', space=vmem, size = 0x12000, scoped, tag = 'internal scratch']
  #allocation2 [shape = 'f32[8,128]{1,0:T(8,128)}', space=vmem, size = 0x1000, scoped, tag = 'scratch operand']
  %s0 = inlined_call_operand.hbm [shape: bf16[24,16,384], index: 0, kind: input, shape index: {}]
  %s1 = inlined_call_operand.hbm [shape: f32[16,128], index: 1, kind: input, shape index: {}]
  %s2 = inlined_call_operand.hbm [shape: f32[128,384], index: 2, kind: input, shape index: {}]
  %s3 = inlined_call_operand.hbm [shape: f32[24,16,128], index: 3, kind: output, shape index: {0}]
  %s4 = inlined_call_operand.hbm [shape: f32[16,128], index: 4, kind: output, shape index: {1}]
  %5 = xla_tuple %s3, %s4
  %s6 = sld [smem:[#allocation0]]
  $region69: #{tpu_custom_call.1} parent=0
    _
  %s8 = ssub.s32 1, %s6
  %s9 = scalar_select 0, %s8, %s6
  $region1: #{tpu_custom_call.1} parent=0
    #allocation3 [shape = 'u8[98304]{0}', space=vmem, size = 0x18000, scoped, tag = 'input window, operand 0']
    #allocation4 [shape = 's32[2]{0}', space=sflag, size = 0x8, scoped, tag = 'scoped memory for tpu_custom_call.1']
    #allocation5 [shape = 's32[2]{0}', space=sflag, size = 0x8, scoped, tag = 'scoped memory for tpu_custom_call.1']
    #allocation6 [shape = 'u8[8192]{0}', space=vmem, size = 0x2000, scoped, tag = 'input window, operand 1']
    #allocation7 [shape = 's32[2]{0}', space=sflag, size = 0x8, scoped, tag = 'scoped memory for tpu_custom_call.1']
    #allocation8 [shape = 'u8[196608]{0}', space=vmem, size = 0x30000, scoped, tag = 'input window, operand 2, single buffered']
    #allocation9 [shape = 'u8[65536]{0}', space=vmem, size = 0x10000, scoped, tag = 'output window, operand 0']
    #allocation10 [shape = 'u8[8192]{0}', space=vmem, size = 0x2000, scoped, tag = 'output window, operand 1']
    #allocation11 [shape = 's32[2]{0}', space=sflag, size = 0x8, scoped, tag = 'scoped memory for tpu_custom_call.1']
    %10 = vsyncpa [#allocation4], 0
    %s11 = scalar_lea.sflag [#allocation4], 1
    %12 = vsyncpa %s11, 0
    %13 = vsyncpa [#allocation7], 0
    %s14 = scalar_lea.sflag [#allocation7], 1
    %15 = vsyncpa %s14, 0
    %16 = vsyncpa [#allocation5], 0
    %s17 = scalar_lea.sflag [#allocation5], 1
    %18 = vsyncpa %s17, 0
    %19 = vsyncpa [#allocation11], 0
    %s20 = scalar_lea.sflag [#allocation11], 1
    %21 = vsyncpa %s20, 0
    loop: start=0, step=1, limit=8
    $region2: #{tpu_custom_call.1} parent=1 // loop_pre_header
      _
    $region3: #{tpu_custom_call.1} parent=1 // loop_header
      %s23 = sphi 0, %s27
      %p24 = scmp.ge.s32.totalorder %s23, 8
      %s30 = sphi 0, %s42
      %s31 = sphi 0, %s38
      %s32 = sphi 0, %s30
      %s33 = sphi 0, %s31
      %s34 = sphi 0, %s32
      %s35 = sphi 0, %s33
      %s47 = sphi 0, %s49
      %s50 = sphi 0, %s47
      %s51 = sphi 0, %s50
      %s67 = sphi 0, %s51
      %s73 = sphi 0, %s75
      %s76 = sphi 0, %s73
      %s77 = sphi 0, %s76
      %s93 = sphi 0, %s77
      %s97 = sphi 0, %s97
      %s99 = sphi 0, %s97
      %s100 = sphi 0, %s99
      %s114 = sphi 0, %s100
      %s122 = sphi 0, %s124
      %s125 = sphi 0, %s122
      %s126 = sphi 0, %s125
      %s142 = sphi 0, %s126
      %s148 = sphi 0, %s150
      %s151 = sphi 0, %s148
      %s152 = sphi 0, %s151
      %s168 = sphi 0, %s152
    $region4: #{tpu_custom_call.1} parent=1 // loop_header_branch
      %26 = sbr.rel (%p24) target = $region8
    $region5: #{tpu_custom_call.1} parent=1 // loop_body
      %s28 = ssub.s32 %s23, 1
      %s29 = ssub.s32 %s23, 2
      %s36 = sadd.s32 1, %s31
      %p37 = scmp.ge.s32.totalorder %s36, 3
      %s38 = scalar_select %p37, 0, %s36
      %s39 = sadd.s32 1, %s30
      %s40 = scalar_select %p37, %s39, %s30
      %p41 = scmp.ge.s32.totalorder %s40, 2
      %s42 = scalar_select %p41, 0, %s40
      %s43 = ssub.s32 %s31, %s38
      %s44 = ssub.s32 %s30, %s42
      %s45 = sor.u32 %s43, %s44
      %p46 = scmp.eq.s32.totalorder %s45, 0
      %s48 = sadd.s32 %s47, 1
      %s49 = scalar_select %p46, %s47, %s48
      %p52 = pneg %p46
      %p53 = scmp.eq.s32.totalorder %s23, 5
      %p54 = por %p52, %p53
      %p55 = scmp.ne.s32.totalorder %s47, %s50
      %p56 = scmp.eq.s32.totalorder %s23, 0
      %p57 = por %p55, %p56
      %p58 = scmp.ne.s32.totalorder %s47, %s50
      %p59 = scmp.eq.s32.totalorder %s28, 5
      %p60 = por %p58, %p59
      %p61 = scmp.ne.s32.totalorder %s50, %s51
      %p62 = scmp.eq.s32.totalorder %s28, 0
      %p63 = por %p61, %p62
      %p64 = scmp.ne.s32.totalorder %s50, %s51
      %p65 = scmp.eq.s32.totalorder %s29, 5
      %p66 = por %p64, %p65
      %p68 = scmp.ne.s32.totalorder %s51, %s67
      %p69 = scmp.eq.s32.totalorder %s29, 0
      %p70 = por %p68, %p69
      %s71 = ssub.s32 %s30, %s42
      %p72 = scmp.eq.s32.totalorder %s71, 0
      %s74 = sadd.s32 %s73, 1
      %s75 = scalar_select %p72, %s73, %s74
      %p78 = pneg %p72
      %p79 = scmp.eq.s32.totalorder %s23, 5
      %p80 = por %p78, %p79
      %p81 = scmp.ne.s32.totalorder %s73, %s76
      %p82 = scmp.eq.s32.totalorder %s23, 0
      %p83 = por %p81, %p82
      %p84 = scmp.ne.s32.totalorder %s73, %s76
      %p85 = scmp.eq.s32.totalorder %s28, 5
      %p86 = por %p84, %p85
      %p87 = scmp.ne.s32.totalorder %s76, %s77
      %p88 = scmp.eq.s32.totalorder %s28, 0
      %p89 = por %p87, %p88
      %p90 = scmp.ne.s32.totalorder %s76, %s77
      %p91 = scmp.eq.s32.totalorder %s29, 5
      %p92 = por %p90, %p91
      %p94 = scmp.ne.s32.totalorder %s77, %s93
      %p95 = scmp.eq.s32.totalorder %s29, 0
      %p96 = por %p94, %p95
      %s98 = sadd.s32 %s97, 1
      %p101 = scmp.eq.s32.totalorder %s23, 5
      %p102 = scmp.ne.s32.totalorder %s97, %s99
      %p103 = scmp.eq.s32.totalorder %s23, 0
      %p104 = por %p102, %p103
      %p105 = scmp.ne.s32.totalorder %s97, %s99
      %p106 = scmp.eq.s32.totalorder %s28, 5
      %p107 = por %p105, %p106
      %p108 = scmp.ne.s32.totalorder %s99, %s100
      %p109 = scmp.eq.s32.totalorder %s28, 0
      %p110 = por %p108, %p109
      %p111 = scmp.ne.s32.totalorder %s99, %s100
      %p112 = scmp.eq.s32.totalorder %s29, 5
      %p113 = por %p111, %p112
      %p115 = scmp.ne.s32.totalorder %s100, %s114
      %p116 = scmp.eq.s32.totalorder %s29, 0
      %p117 = por %p115, %p116
      %s118 = ssub.s32 %s31, %s38
      %s119 = ssub.s32 %s30, %s42
      %s120 = sor.u32 %s118, %s119
      %p121 = scmp.eq.s32.totalorder %s120, 0
      %s123 = sadd.s32 %s122, 1
      %s124 = scalar_select %p121, %s122, %s123
      %p127 = pneg %p121
      %p128 = scmp.eq.s32.totalorder %s23, 5
      %p129 = por %p127, %p128
      %p130 = scmp.ne.s32.totalorder %s122, %s125
      %p131 = scmp.eq.s32.totalorder %s23, 0
      %p132 = por %p130, %p131
      %p133 = scmp.ne.s32.totalorder %s122, %s125
      %p134 = scmp.eq.s32.totalorder %s28, 5
      %p135 = por %p133, %p134
      %p136 = scmp.ne.s32.totalorder %s125, %s126
      %p137 = scmp.eq.s32.totalorder %s28, 0
      %p138 = por %p136, %p137
      %p139 = scmp.ne.s32.totalorder %s125, %s126
      %p140 = scmp.eq.s32.totalorder %s29, 5
      %p141 = por %p139, %p140
      %p143 = scmp.ne.s32.totalorder %s126, %s142
      %p144 = scmp.eq.s32.totalorder %s29, 0
      %p145 = por %p143, %p144
      %s146 = ssub.s32 %s30, %s42
      %p147 = scmp.eq.s32.totalorder %s146, 0
      %s149 = sadd.s32 %s148, 1
      %s150 = scalar_select %p147, %s148, %s149
      %p153 = pneg %p147
      %p154 = scmp.eq.s32.totalorder %s23, 5
      %p155 = por %p153, %p154
      %p156 = scmp.ne.s32.totalorder %s148, %s151
      %p157 = scmp.eq.s32.totalorder %s23, 0
      %p158 = por %p156, %p157
      %p159 = scmp.ne.s32.totalorder %s148, %s151
      %p160 = scmp.eq.s32.totalorder %s28, 5
      %p161 = por %p159, %p160
      %p162 = scmp.ne.s32.totalorder %s151, %s152
      %p163 = scmp.eq.s32.totalorder %s28, 0
      %p164 = por %p162, %p163
      %p165 = scmp.ne.s32.totalorder %s151, %s152
      %p166 = scmp.eq.s32.totalorder %s29, 5
      %p167 = por %p165, %p166
      %p169 = scmp.ne.s32.totalorder %s152, %s168
      %p170 = scmp.eq.s32.totalorder %s29, 0
      %p171 = por %p169, %p170
      %p172 = scmp.le.s32.totalorder 1, %s23
      %p173 = scmp.lt.s32.totalorder %s23, 7
      %p174 = pnand %p172, %p173
      %p175 = pneg %p174
      // Predicated region
      $region9: #{tpu_custom_call.1} parent=5 // pred_check
        _
      $region10: #{tpu_custom_call.1} parent=5 // pred_check_branch
        %177 = sbr.rel (%p174) target = $region12
      $region11: #{tpu_custom_call.1} parent=5 // pred_region
        %s178 = ssub.s32 %s23, 1
        // Predicated region
        $region13: #{tpu_custom_call.1} parent=11 // pred_check
          %p179 = pneg %p110
        $region14: #{tpu_custom_call.1} parent=11 // pred_check_branch
          %181 = sbr.rel (%p179) target = $region16
        $region15: #{tpu_custom_call.1} parent=11 // pred_region
          %s183 = ssub.s32 6144, 6144
          %184 = vsyncadd [#allocation7], %s183
          %s185 = sshll.u32 [#allocation8], 4
          %s186 = int_to_ptr.vmem [resolvable:$true] %s185
          %191 = dma.hbm_to_vmem [thread:$0]  %s2, 6144, %s186, [#allocation7], 384, 384, 24
        $region16: #{tpu_custom_call.1} parent=11 // pred_fallthru
          _
      $region12: #{tpu_custom_call.1} parent=5 // pred_fallthru
        _
      %p192 = scmp.lt.s32.totalorder %s23, 6
      // Predicated region
      $region17: #{tpu_custom_call.1} parent=5 // pred_check
        %p193 = pneg %p192
      $region18: #{tpu_custom_call.1} parent=5 // pred_check_branch
        %195 = sbr.rel (%p193) target = $region20
      $region19: #{tpu_custom_call.1} parent=5 // pred_region
        // Predicated region
        $region21: #{tpu_custom_call.1} parent=19 // pred_check
          %p196 = pneg %p57
        $region22: #{tpu_custom_call.1} parent=19 // pred_check_branch
          %198 = sbr.rel (%p196) target = $region24
        $region23: #{tpu_custom_call.1} parent=19 // pred_region
          %s199 = sand.u32 %s47, 1
          %s200 = scalar_lea.sflag [#allocation4], %s199
          %s201 = sand.u32 %s47, 1
          %s202 = smul.addr %s201, 96
          %s203 = scalar_lea.vmem [#allocation3], %s202
          %s204 = smul.u32 8, %s31
          %s206 = ssub.s32 1536, 1536
          %207 = vsyncadd %s200, %s206
          %s208 = smul.addr %s30, 3
          %s209 = smul.addr %s204, 6
          %s210 = sadd.s32 %s208, %s209
          %s211 = smul.addr %s210, 64
          %s212 = scalar_lea.hbm %s0, %s211
          %s213 = sshll.u32 %s203, 4
          %s214 = int_to_ptr.vmem [resolvable:$true] %s213
          %219 = dma.hbm_to_vmem [thread:$0]  %s212, 1536, %s214, %s200, 384, 192, 12
        $region24: #{tpu_custom_call.1} parent=19 // pred_fallthru
          _
        // Predicated region
        $region25: #{tpu_custom_call.1} parent=19 // pred_check
          %p220 = pneg %p83
        $region26: #{tpu_custom_call.1} parent=19 // pred_check_branch
          %222 = sbr.rel (%p220) target = $region28
        $region27: #{tpu_custom_call.1} parent=19 // pred_region
          %s223 = sand.u32 %s23, 1
          %s224 = scalar_lea.sflag [#allocation7], %s223
          %s225 = sand.u32 %s73, 1
          %s226 = smul.addr %s225, 8
          %s227 = scalar_lea.vmem [#allocation6], %s226
          %s229 = ssub.s32 128, 128
          %230 = vsyncadd %s224, %s229
          %s231 = smul.addr %s30, 128
          %s232 = scalar_lea.hbm %s1, %s231
          %s234 = sshll.u32 %s227, 4
          %s235 = int_to_ptr.vmem [resolvable:$true] %s234
          %237 = dma.hbm_to_vmem [thread:$0]  %s232, 128, %s235, %s224
        $region28: #{tpu_custom_call.1} parent=19 // pred_fallthru
          _
      $region20: #{tpu_custom_call.1} parent=5 // pred_fallthru
        _
      %p238 = scmp.le.s32.totalorder 1, %s23
      %p239 = scmp.lt.s32.totalorder %s23, 7
      %p240 = pnand %p238, %p239
      %p241 = pneg %p240
      // Predicated region
      $region29: #{tpu_custom_call.1} parent=5 // pred_check
        _
      $region30: #{tpu_custom_call.1} parent=5 // pred_check_branch
        %243 = sbr.rel (%p240) target = $region32
      $region31: #{tpu_custom_call.1} parent=5 // pred_region
        %s244 = ssub.s32 %s23, 1
        %s245 = sand.u32 %s50, 1
        %s246 = scalar_lea.sflag [#allocation4], %s245
        %s247 = sand.u32 %s50, 1
        %s248 = smul.addr %s247, 96
        %s249 = scalar_lea.vmem [#allocation3], %s248
        // Predicated region
        $region33: #{tpu_custom_call.1} parent=31 // pred_check
          %p250 = pneg %p63
        $region34: #{tpu_custom_call.1} parent=31 // pred_check_branch
          %252 = sbr.rel (%p250) target = $region36
        $region35: #{tpu_custom_call.1} parent=31 // pred_region
          %253 = dma.done %s246, 1536
        $region36: #{tpu_custom_call.1} parent=31 // pred_fallthru
          _
        %s254 = sand.u32 %s28, 1
        %s255 = scalar_lea.sflag [#allocation7], %s254
        %s256 = sand.u32 %s76, 1
        %s257 = smul.addr %s256, 8
        %s258 = scalar_lea.vmem [#allocation6], %s257
        // Predicated region
        $region37: #{tpu_custom_call.1} parent=31 // pred_check
          %p259 = pneg %p89
        $region38: #{tpu_custom_call.1} parent=31 // pred_check_branch
          %261 = sbr.rel (%p259) target = $region40
        $region39: #{tpu_custom_call.1} parent=31 // pred_region
          %262 = dma.done %s255, 128
        $region40: #{tpu_custom_call.1} parent=31 // pred_fallthru
          _
        // Predicated region
        $region41: #{tpu_custom_call.1} parent=31 // pred_check
          %p263 = pneg %p110
        $region42: #{tpu_custom_call.1} parent=31 // pred_check_branch
          %265 = sbr.rel (%p263) target = $region44
        $region43: #{tpu_custom_call.1} parent=31 // pred_region
          %266 = dma.done [#allocation7], 6144
        $region44: #{tpu_custom_call.1} parent=31 // pred_fallthru
          _
        %s267 = sand.u32 %s50, 1
        %s268 = scalar_lea.sflag [#allocation4], %s267
        %s269 = sand.u32 %s50, 1
        %s270 = smul.addr %s269, 96
        %s271 = scalar_lea.vmem [#allocation3], %s270
        %p272 = pneg %p63
        %p273 = pneg %p60
        %s274 = sand.u32 %s28, 1
        %s275 = scalar_lea.sflag [#allocation7], %s274
        %s276 = sand.u32 %s76, 1
        %s277 = smul.addr %s276, 8
        %s278 = scalar_lea.vmem [#allocation6], %s277
        %p279 = pneg %p89
        %p280 = pneg %p86
        %p281 = pneg %p110
        %p282 = pneg %p107
        %p283 = pneg %p138
        %p284 = pneg %p135
        %s285 = sand.u32 %s125, 1
        %s286 = scalar_lea.sflag [#allocation5], %s285
        %s287 = sand.u32 %s125, 1
        %s288 = smul.addr %s287, 64
        %s289 = scalar_lea.vmem [#allocation9], %s288
        %p290 = pneg %p164
        %p291 = pneg %p161
        %s292 = sand.u32 %s151, 1
        %s293 = scalar_lea.sflag [#allocation11], %s292
        %s294 = sand.u32 %s151, 1
        %s295 = smul.addr %s294, 8
        %s296 = scalar_lea.vmem [#allocation10], %s295
        %s297 = smul.u32 8, %s33
        %s298 = smul.u32 8, %s33
        %p299 = scmp.eq.s32.totalorder %s33, 0
        // Predicated region
        $region45: #{tpu_custom_call.1} parent=31 // pred_check
          %p300 = pneg %p299
        $region46: #{tpu_custom_call.1} parent=31 // pred_check_branch
          %302 = sbr.rel (%p300) target = $region48
        $region47: #{tpu_custom_call.1} parent=31 // pred_region
          %v303 = vld [vmem:[%s258] sm:$0xff]
          %304 = vst [vmem:[#allocation2] sm:$0xff] %v303
        $region48: #{tpu_custom_call.1} parent=31 // pred_fallthru
          _
        %v305 = vld [vmem:[#allocation8] sm:$0xff]
        %v306 = vld [vmem:[#allocation8 + $0x8] sm:$0xff]
        %v307 = vld [vmem:[#allocation8 + $0x10] sm:$0xff]
        %v308 = vld [vmem:[#allocation8 + $0x18] sm:$0xff]
        %v309 = vld [vmem:[#allocation8 + $0x20] sm:$0xff]
        %v310 = vld [vmem:[#allocation8 + $0x28] sm:$0xff]
        %v311 = vld [vmem:[#allocation8 + $0x30] sm:$0xff]
        %v312 = vld [vmem:[#allocation8 + $0x38] sm:$0xff]
        %v313 = vld [vmem:[#allocation8 + $0x40] sm:$0xff]
        %v314 = vld [vmem:[#allocation8 + $0x48] sm:$0xff]
        %v315 = vld [vmem:[#allocation8 + $0x50] sm:$0xff]
        %v316 = vld [vmem:[#allocation8 + $0x58] sm:$0xff]
        %v317 = vld [vmem:[#allocation8 + $0x60] sm:$0xff]
        %v318 = vld [vmem:[#allocation8 + $0x68] sm:$0xff]
        %v319 = vld [vmem:[#allocation8 + $0x70] sm:$0xff]
        %v320 = vld [vmem:[#allocation8 + $0x78] sm:$0xff]
        %v321 = vld [vmem:[#allocation8 + $0x80] sm:$0xff]
        %v322 = vld [vmem:[#allocation8 + $0x88] sm:$0xff]
        %v323 = vld [vmem:[#allocation8 + $0x90] sm:$0xff]
        %v324 = vld [vmem:[#allocation8 + $0x98] sm:$0xff]
        %v325 = vld [vmem:[#allocation8 + $0xa0] sm:$0xff]
        %v326 = vld [vmem:[#allocation8 + $0xa8] sm:$0xff]
        %v327 = vld [vmem:[#allocation8 + $0xb0] sm:$0xff]
        %v328 = vld [vmem:[#allocation8 + $0xb8] sm:$0xff]
        %v329 = vld [vmem:[#allocation8 + $0xc0] sm:$0xff]
        %v330 = vld [vmem:[#allocation8 + $0xc8] sm:$0xff]
        %v331 = vld [vmem:[#allocation8 + $0xd0] sm:$0xff]
        %v332 = vld [vmem:[#allocation8 + $0xd8] sm:$0xff]
        %v333 = vld [vmem:[#allocation8 + $0xe0] sm:$0xff]
        %v334 = vld [vmem:[#allocation8 + $0xe8] sm:$0xff]
        %v335 = vld [vmem:[#allocation8 + $0xf0] sm:$0xff]
        %v336 = vld [vmem:[#allocation8 + $0xf8] sm:$0xff]
        %v337 = vld [vmem:[#allocation8 + $0x100] sm:$0xff]
        %v338 = vld [vmem:[#allocation8 + $0x108] sm:$0xff]
        %v339 = vld [vmem:[#allocation8 + $0x110] sm:$0xff]
        %v340 = vld [vmem:[#allocation8 + $0x118] sm:$0xff]
        %v341 = vld [vmem:[#allocation8 + $0x120] sm:$0xff]
        %v342 = vld [vmem:[#allocation8 + $0x128] sm:$0xff]
        %v343 = vld [vmem:[#allocation8 + $0x130] sm:$0xff]
        %v344 = vld [vmem:[#allocation8 + $0x138] sm:$0xff]
        %v345 = vld [vmem:[#allocation8 + $0x140] sm:$0xff]
        %v346 = vld [vmem:[#allocation8 + $0x148] sm:$0xff]
        %v347 = vld [vmem:[#allocation8 + $0x150] sm:$0xff]
        %v348 = vld [vmem:[#allocation8 + $0x158] sm:$0xff]
        %v349 = vld [vmem:[#allocation8 + $0x160] sm:$0xff]
        %v350 = vld [vmem:[#allocation8 + $0x168] sm:$0xff]
        %v351 = vld [vmem:[#allocation8 + $0x170] sm:$0xff]
        %v352 = vld [vmem:[#allocation8 + $0x178] sm:$0xff]
        %v353 = vld [vmem:[#allocation2] sm:$0xff]
        %s354 = smul.u32 %s33, 8
        %v355 = vld [vmem:[%s249] sm:$0xff]
        %v356 = vld [vmem:[%s249 + $0x8] sm:$0xf]
        %v357 = vunpack.c.l.bf16 %v355
        %v358 = vunpack.c.h.bf16 %v355
        %v359 = vunpack.c.l.bf16 %v356
        %360 = vmatprep.subr.mxu0 %v306
        %361 = vmatpush1.msra.mxu0 %v305
        %362 = vmatprep.subr.mxu0 %v309
        %363 = vmatpush1.msra.mxu0 %v308
        %364 = vmatprep.subr.mxu0 %v312
        %365 = vmatpush1.msra.mxu0 %v311
        %366 = vmatprep.subr.mxu0 %v315
        %367 = vmatpush1.msra.mxu0 %v314
        %368 = vmatprep.subr.mxu0 %v318
        %369 = vmatpush1.msra.mxu0 %v317
        %370 = vmatprep.subr.mxu0 %v321
        %371 = vmatpush1.msra.mxu0 %v320
        %372 = vmatprep.subr.mxu0 %v324
        %373 = vmatpush1.msra.mxu0 %v323
        %374 = vmatprep.subr.mxu0 %v327
        %375 = vmatpush1.msra.mxu0 %v326
        %376 = vmatprep.subr.mxu0 %v330
        %377 = vmatpush1.msra.mxu0 %v329
        %378 = vmatprep.subr.mxu0 %v333
        %379 = vmatpush1.msra.mxu0 %v332
        %380 = vmatprep.subr.mxu0 %v336
        %381 = vmatpush1.msra.mxu0 %v335
        %382 = vmatprep.subr.mxu0 %v339
        %383 = vmatpush1.msra.mxu0 %v338
        %384 = vmatprep.subr.mxu0 %v342
        %385 = vmatpush1.msra.mxu0 %v341
        %386 = vmatprep.subr.mxu0 %v345
        %387 = vmatpush1.msra.mxu0 %v344
        %388 = vmatprep.subr.mxu0 %v348
        %389 = vmatpush1.msra.mxu0 %v347
        %390 = vmatprep.subr.mxu0 %v351
        %391 = vmatpush1.msra.mxu0 %v350
        %392 = vmatprep.subr.mxu0 0.0
        %393 = vmatpush1.msra.mxu0 0.0
        %394 = vmatprep.subr.mxu0 0.0
        %395 = vmatpush1.msra.mxu0 0.0
        %396 = vmatprep.subr.mxu0 0.0
        %397 = vmatpush1.msra.mxu0 0.0
        %398 = vmatprep.subr.mxu0 0.0
        %399 = vmatpush1.msra.mxu0 0.0
        %400 = vmatprep.subr.mxu0 0.0
        %401 = vmatpush1.msra.mxu0 0.0
        %402 = vmatprep.subr.mxu0 0.0
        %403 = vmatpush1.msra.mxu0 0.0
        %404 = vmatprep.subr.mxu0 0.0
        %405 = vmatpush1.msra.mxu0 0.0
        %406 = vmatprep.subr.mxu0 0.0
        %407 = vmatpush1.msra.mxu0 0.0
        %408 = vmatprep.subr.mxu0 0.0
        %409 = vmatpush1.msra.mxu0 0.0
        %410 = vmatprep.subr.mxu0 0.0
        %411 = vmatpush1.msra.mxu0 0.0
        %412 = vmatprep.subr.mxu0 0.0
        %413 = vmatpush1.msra.mxu0 0.0
        %414 = vmatprep.subr.mxu0 0.0
        %415 = vmatpush1.msra.mxu0 0.0
        %416 = vmatprep.subr.mxu0 0.0
        %417 = vmatpush1.msra.mxu0 0.0
        %418 = vmatprep.subr.mxu0 0.0
        %419 = vmatpush1.msra.mxu0 0.0
        %420 = vmatprep.subr.mxu0 0.0
        %421 = vmatpush1.msra.mxu0 0.0
        %422 = vmatprep.subr.mxu0 0.0
        %423 = vmatpush1.msra.mxu0 0.0
        %424 = vmatprep.mubr.f32.mxu0 0.0
        %425 = vmatmul.mubr.f32.gmra.mrb[0].mxu0 %v353
        %v426 = vpop.f32.mrb[0].mxu0
        %v427 = vadd.f32 0.0, %v426
        %v428 = vpop.f32.mrb[0].mxu0
        %v429 = vadd.f32 0.0, %v428
        %430 = vdwg.mxu0
        %431 = vmatprep.subr.mxu0 0.0
        %432 = vmatpush1.msra.mxu0 %v307
        %433 = vmatprep.subr.mxu0 0.0
        %434 = vmatpush1.msra.mxu0 %v310
        %435 = vmatprep.subr.mxu0 0.0
        %436 = vmatpush1.msra.mxu0 %v313
        %437 = vmatprep.subr.mxu0 0.0
        %438 = vmatpush1.msra.mxu0 %v316
        %439 = vmatprep.subr.mxu0 0.0
        %440 = vmatpush1.msra.mxu0 %v319
        %441 = vmatprep.subr.mxu0 0.0
        %442 = vmatpush1.msra.mxu0 %v322
        %443 = vmatprep.subr.mxu0 0.0
        %444 = vmatpush1.msra.mxu0 %v325
        %445 = vmatprep.subr.mxu0 0.0
        %446 = vmatpush1.msra.mxu0 %v328
        %447 = vmatprep.subr.mxu0 0.0
        %448 = vmatpush1.msra.mxu0 %v331
        %449 = vmatprep.subr.mxu0 0.0
        %450 = vmatpush1.msra.mxu0 %v334
        %451 = vmatprep.subr.mxu0 0.0
        %452 = vmatpush1.msra.mxu0 %v337
        %453 = vmatprep.subr.mxu0 0.0
        %454 = vmatpush1.msra.mxu0 %v340
        %455 = vmatprep.subr.mxu0 0.0
        %456 = vmatpush1.msra.mxu0 %v343
        %457 = vmatprep.subr.mxu0 0.0
        %458 = vmatpush1.msra.mxu0 %v346
        %459 = vmatprep.subr.mxu0 0.0
        %460 = vmatpush1.msra.mxu0 %v349
        %461 = vmatprep.subr.mxu0 0.0
        %462 = vmatpush1.msra.mxu0 %v352
        %463 = vmatprep.subr.mxu0 0.0
        %464 = vmatpush1.msra.mxu0 0.0
        %465 = vmatprep.subr.mxu0 0.0
        %466 = vmatpush1.msra.mxu0 0.0
        %467 = vmatprep.subr.mxu0 0.0
        %468 = vmatpush1.msra.mxu0 0.0
        %469 = vmatprep.subr.mxu0 0.0
        %470 = vmatpush1.msra.mxu0 0.0
        %471 = vmatprep.subr.mxu0 0.0
        %472 = vmatpush1.msra.mxu0 0.0
        %473 = vmatprep.subr.mxu0 0.0
        %474 = vmatpush1.msra.mxu0 0.0
        %475 = vmatprep.subr.mxu0 0.0
        %476 = vmatpush1.msra.mxu0 0.0
        %477 = vmatprep.subr.mxu0 0.0
        %478 = vmatpush1.msra.mxu0 0.0
        %479 = vmatprep.subr.mxu0 0.0
        %480 = vmatpush1.msra.mxu0 0.0
        %481 = vmatprep.subr.mxu0 0.0
        %482 = vmatpush1.msra.mxu0 0.0
        %483 = vmatprep.subr.mxu0 0.0
        %484 = vmatpush1.msra.mxu0 0.0
        %485 = vmatprep.subr.mxu0 0.0
        %486 = vmatpush1.msra.mxu0 0.0
        %487 = vmatprep.subr.mxu0 0.0
        %488 = vmatpush1.msra.mxu0 0.0
        %489 = vmatprep.subr.mxu0 0.0
        %490 = vmatpush1.msra.mxu0 0.0
        %491 = vmatprep.subr.mxu0 0.0
        %492 = vmatpush1.msra.mxu0 0.0
        %493 = vmatprep.subr.mxu0 0.0
        %494 = vmatpush1.msra.mxu0 0.0
        %495 = vmatprep.mubr.f32.mxu0 0.0
        %496 = vmatmul.mubr.f32.gmra.mrb[0].mxu0 %v353
        %v497 = vpop.f32.mrb[0].mxu0
        %v498 = vadd.f32 0.0, %v497
        %v499 = vpop.f32.mrb[0].mxu0
        %500 = vdwg.mxu0
        %v501 = vadd.f32 %v357, %v427
        %v502 = vadd.f32 %v358, %v429
        %v503 = vadd.f32 %v359, %v498
        %v504 = vmul.f32 %v501, 0.5
        %v505 = vtanh.pop %v504
        %v506 = vadd.f32 %v505, 1.0
        %v507 = vmul.f32 %v506, 0.5
        %v508 = vmul.f32 %v502, 0.5
        %v509 = vtanh.pop %v508
        %v510 = vadd.f32 %v509, 1.0
        %v511 = vmul.f32 %v510, 0.5
        %v512 = vmul.f32 %v507, %v503
        %v513 = vtanh.pop %v512
        %v514 = vsub.f32 %v513, %v353
        %v515 = vmul.f32 %v511, %v514
        %v516 = vadd.f32 %v353, %v515
        %517 = vst [vmem:[%s289] sm:$0xff] %v516
        %p518 = scmp.lt.s32.totalorder %s354, 20
        %s519 = scalar_select %p518, 1, 0
        %v520 = vstv %s519
        %vm521 = vcmp.eq.s32.totalorder %v520, 1
        %v522 = vsel %vm521, %v516, %v353
        %s523 = sadd.s32 %s354, 1
        %s524 = scalar_lea.vmem %s249, 12 [#allocation3]
        %v525 = vld [vmem:[%s524] sm:$0xff]
        %v526 = vld [vmem:[%s524 + $0x8] sm:$0xf]
        %v527 = vunpack.c.l.bf16 %v525
        %v528 = vunpack.c.h.bf16 %v525
        %v529 = vunpack.c.l.bf16 %v526
        %530 = vmatprep.subr.mxu0 %v306
        %531 = vmatpush1.msra.mxu0 %v305
        %532 = vmatprep.subr.mxu0 %v309
        %533 = vmatpush1.msra.mxu0 %v308
        %534 = vmatprep.subr.mxu0 %v312
        %535 = vmatpush1.msra.mxu0 %v311
        %536 = vmatprep.subr.mxu0 %v315
        %537 = vmatpush1.msra.mxu0 %v314
        %538 = vmatprep.subr.mxu0 %v318
        %539 = vmatpush1.msra.mxu0 %v317
        %540 = vmatprep.subr.mxu0 %v321
        %541 = vmatpush1.msra.mxu0 %v320
        %542 = vmatprep.subr.mxu0 %v324
        %543 = vmatpush1.msra.mxu0 %v323
        %544 = vmatprep.subr.mxu0 %v327
        %545 = vmatpush1.msra.mxu0 %v326
        %546 = vmatprep.subr.mxu0 %v330
        %547 = vmatpush1.msra.mxu0 %v329
        %548 = vmatprep.subr.mxu0 %v333
        %549 = vmatpush1.msra.mxu0 %v332
        %550 = vmatprep.subr.mxu0 %v336
        %551 = vmatpush1.msra.mxu0 %v335
        %552 = vmatprep.subr.mxu0 %v339
        %553 = vmatpush1.msra.mxu0 %v338
        %554 = vmatprep.subr.mxu0 %v342
        %555 = vmatpush1.msra.mxu0 %v341
        %556 = vmatprep.subr.mxu0 %v345
        %557 = vmatpush1.msra.mxu0 %v344
        %558 = vmatprep.subr.mxu0 %v348
        %559 = vmatpush1.msra.mxu0 %v347
        %560 = vmatprep.subr.mxu0 %v351
        %561 = vmatpush1.msra.mxu0 %v350
        %562 = vmatprep.subr.mxu0 0.0
        %563 = vmatpush1.msra.mxu0 0.0
        %564 = vmatprep.subr.mxu0 0.0
        %565 = vmatpush1.msra.mxu0 0.0
        %566 = vmatprep.subr.mxu0 0.0
        %567 = vmatpush1.msra.mxu0 0.0
        %568 = vmatprep.subr.mxu0 0.0
        %569 = vmatpush1.msra.mxu0 0.0
        %570 = vmatprep.subr.mxu0 0.0
        %571 = vmatpush1.msra.mxu0 0.0
        %572 = vmatprep.subr.mxu0 0.0
        %573 = vmatpush1.msra.mxu0 0.0
        %574 = vmatprep.subr.mxu0 0.0
        %575 = vmatpush1.msra.mxu0 0.0
        %576 = vmatprep.subr.mxu0 0.0
        %577 = vmatpush1.msra.mxu0 0.0
        %578 = vmatprep.subr.mxu0 0.0
        %579 = vmatpush1.msra.mxu0 0.0
        %580 = vmatprep.subr.mxu0 0.0
        %581 = vmatpush1.msra.mxu0 0.0
        %582 = vmatprep.subr.mxu0 0.0
        %583 = vmatpush1.msra.mxu0 0.0
        %584 = vmatprep.subr.mxu0 0.0
        %585 = vmatpush1.msra.mxu0 0.0
        %586 = vmatprep.subr.mxu0 0.0
        %587 = vmatpush1.msra.mxu0 0.0
        %588 = vmatprep.subr.mxu0 0.0
        %589 = vmatpush1.msra.mxu0 0.0
        %590 = vmatprep.subr.mxu0 0.0
        %591 = vmatpush1.msra.mxu0 0.0
        %592 = vmatprep.subr.mxu0 0.0
        %593 = vmatpush1.msra.mxu0 0.0
        %594 = vmatprep.mubr.f32.mxu0 0.0
        %595 = vmatmul.mubr.f32.gmra.mrb[0].mxu0 %v522
        %v596 = vpop.f32.mrb[0].mxu0
        %v597 = vadd.f32 0.0, %v596
        %v598 = vpop.f32.mrb[0].mxu0
        %v599 = vadd.f32 0.0, %v598
        %600 = vdwg.mxu0
        %601 = vmatprep.subr.mxu0 0.0
        %602 = vmatpush1.msra.mxu0 %v307
        %603 = vmatprep.subr.mxu0 0.0
        %604 = vmatpush1.msra.mxu0 %v310
        %605 = vmatprep.subr.mxu0 0.0
        %606 = vmatpush1.msra.mxu0 %v313
        %607 = vmatprep.subr.mxu0 0.0
        %608 = vmatpush1.msra.mxu0 %v316
        %609 = vmatprep.subr.mxu0 0.0
        %610 = vmatpush1.msra.mxu0 %v319
        %611 = vmatprep.subr.mxu0 0.0
        %612 = vmatpush1.msra.mxu0 %v322
        %613 = vmatprep.subr.mxu0 0.0
        %614 = vmatpush1.msra.mxu0 %v325
        %615 = vmatprep.subr.mxu0 0.0
        %616 = vmatpush1.msra.mxu0 %v328
        %617 = vmatprep.subr.mxu0 0.0
        %618 = vmatpush1.msra.mxu0 %v331
        %619 = vmatprep.subr.mxu0 0.0
        %620 = vmatpush1.msra.mxu0 %v334
        %621 = vmatprep.subr.mxu0 0.0
        %622 = vmatpush1.msra.mxu0 %v337
        %623 = vmatprep.subr.mxu0 0.0
        %624 = vmatpush1.msra.mxu0 %v340
        %625 = vmatprep.subr.mxu0 0.0
        %626 = vmatpush1.msra.mxu0 %v343
        %627 = vmatprep.subr.mxu0 0.0
        %628 = vmatpush1.msra.mxu0 %v346
        %629 = vmatprep.subr.mxu0 0.0
        %630 = vmatpush1.msra.mxu0 %v349
        %631 = vmatprep.subr.mxu0 0.0
        %632 = vmatpush1.msra.mxu0 %v352
        %633 = vmatprep.subr.mxu0 0.0
        %634 = vmatpush1.msra.mxu0 0.0
        %635 = vmatprep.subr.mxu0 0.0
        %636 = vmatpush1.msra.mxu0 0.0
        %637 = vmatprep.subr.mxu0 0.0
        %638 = vmatpush1.msra.mxu0 0.0
        %639 = vmatprep.subr.mxu0 0.0
        %640 = vmatpush1.msra.mxu0 0.0
        %641 = vmatprep.subr.mxu0 0.0
        %642 = vmatpush1.msra.mxu0 0.0
        %643 = vmatprep.subr.mxu0 0.0
        %644 = vmatpush1.msra.mxu0 0.0
        %645 = vmatprep.subr.mxu0 0.0
        %646 = vmatpush1.msra.mxu0 0.0
        %647 = vmatprep.subr.mxu0 0.0
        %648 = vmatpush1.msra.mxu0 0.0
        %649 = vmatprep.subr.mxu0 0.0
        %650 = vmatpush1.msra.mxu0 0.0
        %651 = vmatprep.subr.mxu0 0.0
        %652 = vmatpush1.msra.mxu0 0.0
        %653 = vmatprep.subr.mxu0 0.0
        %654 = vmatpush1.msra.mxu0 0.0
        %655 = vmatprep.subr.mxu0 0.0
        %656 = vmatpush1.msra.mxu0 0.0
        %657 = vmatprep.subr.mxu0 0.0
        %658 = vmatpush1.msra.mxu0 0.0
        %659 = vmatprep.subr.mxu0 0.0
        %660 = vmatpush1.msra.mxu0 0.0
        %661 = vmatprep.subr.mxu0 0.0
        %662 = vmatpush1.msra.mxu0 0.0
        %663 = vmatprep.subr.mxu0 0.0
        %664 = vmatpush1.msra.mxu0 0.0
        %665 = vmatprep.mubr.f32.mxu0 0.0
        %666 = vmatmul.mubr.f32.gmra.mrb[0].mxu0 %v522
        %v667 = vpop.f32.mrb[0].mxu0
        %v668 = vadd.f32 0.0, %v667
        %v669 = vpop.f32.mrb[0].mxu0
        %670 = vdwg.mxu0
        %v671 = vadd.f32 %v527, %v597
        %v672 = vadd.f32 %v528, %v599
        %v673 = vadd.f32 %v529, %v668
        %v674 = vmul.f32 %v671, 0.5
        %v675 = vtanh.pop %v674
        %v676 = vadd.f32 %v675, 1.0
        %v677 = vmul.f32 %v676, 0.5
        %v678 = vmul.f32 %v672, 0.5
        %v679 = vtanh.pop %v678
        %v680 = vadd.f32 %v679, 1.0
        %v681 = vmul.f32 %v680, 0.5
        %v682 = vmul.f32 %v677, %v673
        %v683 = vtanh.pop %v682
        %v684 = vsub.f32 %v683, %v522
        %v685 = vmul.f32 %v681, %v684
        %v686 = vadd.f32 %v522, %v685
        %s687 = scalar_lea.vmem %s289, 8 [#allocation9]
        %688 = vst [vmem:[%s687] sm:$0xff] %v686
        %p689 = scmp.lt.s32.totalorder %s523, 20
        %s690 = scalar_select %p689, 1, 0
        %v691 = vstv %s690
        %vm692 = vcmp.eq.s32.totalorder %v691, 1
        %v693 = vsel %vm692, %v686, %v522
        %s694 = sadd.s32 %s354, 2
        %s695 = scalar_lea.vmem %s249, 24 [#allocation3]
        %v696 = vld [vmem:[%s695] sm:$0xff]
        %v697 = vld [vmem:[%s695 + $0x8] sm:$0xf]
        %v698 = vunpack.c.l.bf16 %v696
        %v699 = vunpack.c.h.bf16 %v696
        %v700 = vunpack.c.l.bf16 %v697
        %701 = vmatprep.subr.mxu0 %v306
        %702 = vmatpush1.msra.mxu0 %v305
        %703 = vmatprep.subr.mxu0 %v309
        %704 = vmatpush1.msra.mxu0 %v308
        %705 = vmatprep.subr.mxu0 %v312
        %706 = vmatpush1.msra.mxu0 %v311
        %707 = vmatprep.subr.mxu0 %v315
        %708 = vmatpush1.msra.mxu0 %v314
        %709 = vmatprep.subr.mxu0 %v318
        %710 = vmatpush1.msra.mxu0 %v317
        %711 = vmatprep.subr.mxu0 %v321
        %712 = vmatpush1.msra.mxu0 %v320
        %713 = vmatprep.subr.mxu0 %v324
        %714 = vmatpush1.msra.mxu0 %v323
        %715 = vmatprep.subr.mxu0 %v327
        %716 = vmatpush1.msra.mxu0 %v326
        %717 = vmatprep.subr.mxu0 %v330
        %718 = vmatpush1.msra.mxu0 %v329
        %719 = vmatprep.subr.mxu0 %v333
        %720 = vmatpush1.msra.mxu0 %v332
        %721 = vmatprep.subr.mxu0 %v336
        %722 = vmatpush1.msra.mxu0 %v335
        %723 = vmatprep.subr.mxu0 %v339
        %724 = vmatpush1.msra.mxu0 %v338
        %725 = vmatprep.subr.mxu0 %v342
        %726 = vmatpush1.msra.mxu0 %v341
        %727 = vmatprep.subr.mxu0 %v345
        %728 = vmatpush1.msra.mxu0 %v344
        %729 = vmatprep.subr.mxu0 %v348
        %730 = vmatpush1.msra.mxu0 %v347
        %731 = vmatprep.subr.mxu0 %v351
        %732 = vmatpush1.msra.mxu0 %v350
        %733 = vmatprep.subr.mxu0 0.0
        %734 = vmatpush1.msra.mxu0 0.0
        %735 = vmatprep.subr.mxu0 0.0
        %736 = vmatpush1.msra.mxu0 0.0
        %737 = vmatprep.subr.mxu0 0.0
        %738 = vmatpush1.msra.mxu0 0.0
        %739 = vmatprep.subr.mxu0 0.0
        %740 = vmatpush1.msra.mxu0 0.0
        %741 = vmatprep.subr.mxu0 0.0
        %742 = vmatpush1.msra.mxu0 0.0
        %743 = vmatprep.subr.mxu0 0.0
        %744 = vmatpush1.msra.mxu0 0.0
        %745 = vmatprep.subr.mxu0 0.0
        %746 = vmatpush1.msra.mxu0 0.0
        %747 = vmatprep.subr.mxu0 0.0
        %748 = vmatpush1.msra.mxu0 0.0
        %749 = vmatprep.subr.mxu0 0.0
        %750 = vmatpush1.msra.mxu0 0.0
        %751 = vmatprep.subr.mxu0 0.0
        %752 = vmatpush1.msra.mxu0 0.0
        %753 = vmatprep.subr.mxu0 0.0
        %754 = vmatpush1.msra.mxu0 0.0
        %755 = vmatprep.subr.mxu0 0.0
        %756 = vmatpush1.msra.mxu0 0.0
        %757 = vmatprep.subr.mxu0 0.0
        %758 = vmatpush1.msra.mxu0 0.0
        %759 = vmatprep.subr.mxu0 0.0
        %760 = vmatpush1.msra.mxu0 0.0
        %761 = vmatprep.subr.mxu0 0.0
        %762 = vmatpush1.msra.mxu0 0.0
        %763 = vmatprep.subr.mxu0 0.0
        %764 = vmatpush1.msra.mxu0 0.0
        %765 = vmatprep.mubr.f32.mxu0 0.0
        %766 = vmatmul.mubr.f32.gmra.mrb[0].mxu0 %v693
        %v767 = vpop.f32.mrb[0].mxu0
        %v768 = vadd.f32 0.0, %v767
        %v769 = vpop.f32.mrb[0].mxu0
        %v770 = vadd.f32 0.0, %v769
        %771 = vdwg.mxu0
        %772 = vmatprep.subr.mxu0 0.0
        %773 = vmatpush1.msra.mxu0 %v307
        %774 = vmatprep.subr.mxu0 0.0
        %775 = vmatpush1.msra.mxu0 %v310
        %776 = vmatprep.subr.mxu0 0.0
        %777 = vmatpush1.msra.mxu0 %v313
        %778 = vmatprep.subr.mxu0 0.0
        %779 = vmatpush1.msra.mxu0 %v316
        %780 = vmatprep.subr.mxu0 0.0
        %781 = vmatpush1.msra.mxu0 %v319
        %782 = vmatprep.subr.mxu0 0.0
        %783 = vmatpush1.msra.mxu0 %v322
        %784 = vmatprep.subr.mxu0 0.0
        %785 = vmatpush1.msra.mxu0 %v325
        %786 = vmatprep.subr.mxu0 0.0
        %787 = vmatpush1.msra.mxu0 %v328
        %788 = vmatprep.subr.mxu0 0.0
        %789 = vmatpush1.msra.mxu0 %v331
        %790 = vmatprep.subr.mxu0 0.0
        %791 = vmatpush1.msra.mxu0 %v334
        %792 = vmatprep.subr.mxu0 0.0
        %793 = vmatpush1.msra.mxu0 %v337
        %794 = vmatprep.subr.mxu0 0.0
        %795 = vmatpush1.msra.mxu0 %v340
        %796 = vmatprep.subr.mxu0 0.0
        %797 = vmatpush1.msra.mxu0 %v343
        %798 = vmatprep.subr.mxu0 0.0
        %799 = vmatpush1.msra.mxu0 %v346
        %800 = vmatprep.subr.mxu0 0.0
        %801 = vmatpush1.msra.mxu0 %v349
        %802 = vmatprep.subr.mxu0 0.0
        %803 = vmatpush1.msra.mxu0 %v352
        %804 = vmatprep.subr.mxu0 0.0
        %805 = vmatpush1.msra.mxu0 0.0
        %806 = vmatprep.subr.mxu0 0.0
        %807 = vmatpush1.msra.mxu0 0.0
        %808 = vmatprep.subr.mxu0 0.0
        %809 = vmatpush1.msra.mxu0 0.0
        %810 = vmatprep.subr.mxu0 0.0
        %811 = vmatpush1.msra.mxu0 0.0
        %812 = vmatprep.subr.mxu0 0.0
        %813 = vmatpush1.msra.mxu0 0.0
        %814 = vmatprep.subr.mxu0 0.0
        %815 = vmatpush1.msra.mxu0 0.0
        %816 = vmatprep.subr.mxu0 0.0
        %817 = vmatpush1.msra.mxu0 0.0
        %818 = vmatprep.subr.mxu0 0.0
        %819 = vmatpush1.msra.mxu0 0.0
        %820 = vmatprep.subr.mxu0 0.0
        %821 = vmatpush1.msra.mxu0 0.0
        %822 = vmatprep.subr.mxu0 0.0
        %823 = vmatpush1.msra.mxu0 0.0
        %824 = vmatprep.subr.mxu0 0.0
        %825 = vmatpush1.msra.mxu0 0.0
        %826 = vmatprep.subr.mxu0 0.0
        %827 = vmatpush1.msra.mxu0 0.0
        %828 = vmatprep.subr.mxu0 0.0
        %829 = vmatpush1.msra.mxu0 0.0
        %830 = vmatprep.subr.mxu0 0.0
        %831 = vmatpush1.msra.mxu0 0.0
        %832 = vmatprep.subr.mxu0 0.0
        %833 = vmatpush1.msra.mxu0 0.0
        %834 = vmatprep.subr.mxu0 0.0
        %835 = vmatpush1.msra.mxu0 0.0
        %836 = vmatprep.mubr.f32.mxu0 0.0
        %837 = vmatmul.mubr.f32.gmra.mrb[0].mxu0 %v693
        %v838 = vpop.f32.mrb[0].mxu0
        %v839 = vadd.f32 0.0, %v838
        %v840 = vpop.f32.mrb[0].mxu0
        %841 = vdwg.mxu0
        %v842 = vadd.f32 %v698, %v768
        %v843 = vadd.f32 %v699, %v770
        %v844 = vadd.f32 %v700, %v839
        %v845 = vmul.f32 %v842, 0.5
        %v846 = vtanh.pop %v845
        %v847 = vadd.f32 %v846, 1.0
        %v848 = vmul.f32 %v847, 0.5
        %v849 = vmul.f32 %v843, 0.5
        %v850 = vtanh.pop %v849
        %v851 = vadd.f32 %v850, 1.0
        %v852 = vmul.f32 %v851, 0.5
        %v853 = vmul.f32 %v848, %v844
        %v854 = vtanh.pop %v853
        %v855 = vsub.f32 %v854, %v693
        %v856 = vmul.f32 %v852, %v855
        %v857 = vadd.f32 %v693, %v856
        %s858 = scalar_lea.vmem %s289, 16 [#allocation9]
        %859 = vst [vmem:[%s858] sm:$0xff] %v857
        %p860 = scmp.lt.s32.totalorder %s694, 20
        %s861 = scalar_select %p860, 1, 0
        %v862 = vstv %s861
        %vm863 = vcmp.eq.s32.totalorder %v862, 1
        %v864 = vsel %vm863, %v857, %v693
        %s865 = sadd.s32 %s354, 3
        %s866 = scalar_lea.vmem %s249, 36 [#allocation3]
        %v867 = vld [vmem:[%s866] sm:$0xff]
        %v868 = vld [vmem:[%s866 + $0x8] sm:$0xf]
        %v869 = vunpack.c.l.bf16 %v867
        %v870 = vunpack.c.h.bf16 %v867
        %v871 = vunpack.c.l.bf16 %v868
        %872 = vmatprep.subr.mxu0 %v306
        %873 = vmatpush1.msra.mxu0 %v305
        %874 = vmatprep.subr.mxu0 %v309
        %875 = vmatpush1.msra.mxu0 %v308
        %876 = vmatprep.subr.mxu0 %v312
        %877 = vmatpush1.msra.mxu0 %v311
        %878 = vmatprep.subr.mxu0 %v315
        %879 = vmatpush1.msra.mxu0 %v314
        %880 = vmatprep.subr.mxu0 %v318
        %881 = vmatpush1.msra.mxu0 %v317
        %882 = vmatprep.subr.mxu0 %v321
        %883 = vmatpush1.msra.mxu0 %v320
        %884 = vmatprep.subr.mxu0 %v324
        %885 = vmatpush1.msra.mxu0 %v323
        %886 = vmatprep.subr.mxu0 %v327
        %887 = vmatpush1.msra.mxu0 %v326
        %888 = vmatprep.subr.mxu0 %v330
        %889 = vmatpush1.msra.mxu0 %v329
        %890 = vmatprep.subr.mxu0 %v333
        %891 = vmatpush1.msra.mxu0 %v332
        %892 = vmatprep.subr.mxu0 %v336
        %893 = vmatpush1.msra.mxu0 %v335
        %894 = vmatprep.subr.mxu0 %v339
        %895 = vmatpush1.msra.mxu0 %v338
        %896 = vmatprep.subr.mxu0 %v342
        %897 = vmatpush1.msra.mxu0 %v341
        %898 = vmatprep.subr.mxu0 %v345
        %899 = vmatpush1.msra.mxu0 %v344
        %900 = vmatprep.subr.mxu0 %v348
        %901 = vmatpush1.msra.mxu0 %v347
        %902 = vmatprep.subr.mxu0 %v351
        %903 = vmatpush1.msra.mxu0 %v350
        %904 = vmatprep.subr.mxu0 0.0
        %905 = vmatpush1.msra.mxu0 0.0
        %906 = vmatprep.subr.mxu0 0.0
        %907 = vmatpush1.msra.mxu0 0.0
        %908 = vmatprep.subr.mxu0 0.0
        %909 = vmatpush1.msra.mxu0 0.0
        %910 = vmatprep.subr.mxu0 0.0
        %911 = vmatpush1.msra.mxu0 0.0
        %912 = vmatprep.subr.mxu0 0.0
        %913 = vmatpush1.msra.mxu0 0.0
        %914 = vmatprep.subr.mxu0 0.0
        %915 = vmatpush1.msra.mxu0 0.0
        %916 = vmatprep.subr.mxu0 0.0
        %917 = vmatpush1.msra.mxu0 0.0
        %918 = vmatprep.subr.mxu0 0.0
        %919 = vmatpush1.msra.mxu0 0.0
        %920 = vmatprep.subr.mxu0 0.0
        %921 = vmatpush1.msra.mxu0 0.0
        %922 = vmatprep.subr.mxu0 0.0
        %923 = vmatpush1.msra.mxu0 0.0
        %924 = vmatprep.subr.mxu0 0.0
        %925 = vmatpush1.msra.mxu0 0.0
        %926 = vmatprep.subr.mxu0 0.0
        %927 = vmatpush1.msra.mxu0 0.0
        %928 = vmatprep.subr.mxu0 0.0
        %929 = vmatpush1.msra.mxu0 0.0
        %930 = vmatprep.subr.mxu0 0.0
        %931 = vmatpush1.msra.mxu0 0.0
        %932 = vmatprep.subr.mxu0 0.0
        %933 = vmatpush1.msra.mxu0 0.0
        %934 = vmatprep.subr.mxu0 0.0
        %935 = vmatpush1.msra.mxu0 0.0
        %936 = vmatprep.mubr.f32.mxu0 0.0
        %937 = vmatmul.mubr.f32.gmra.mrb[0].mxu0 %v864
        %v938 = vpop.f32.mrb[0].mxu0
        %v939 = vadd.f32 0.0, %v938
        %v940 = vpop.f32.mrb[0].mxu0
        %v941 = vadd.f32 0.0, %v940
        %942 = vdwg.mxu0
        %943 = vmatprep.subr.mxu0 0.0
        %944 = vmatpush1.msra.mxu0 %v307
        %945 = vmatprep.subr.mxu0 0.0
        %946 = vmatpush1.msra.mxu0 %v310
        %947 = vmatprep.subr.mxu0 0.0
        %948 = vmatpush1.msra.mxu0 %v313
        %949 = vmatprep.subr.mxu0 0.0
        %950 = vmatpush1.msra.mxu0 %v316
        %951 = vmatprep.subr.mxu0 0.0
        %952 = vmatpush1.msra.mxu0 %v319
        %953 = vmatprep.subr.mxu0 0.0
        %954 = vmatpush1.msra.mxu0 %v322
        %955 = vmatprep.subr.mxu0 0.0
        %956 = vmatpush1.msra.mxu0 %v325
        %957 = vmatprep.subr.mxu0 0.0
        %958 = vmatpush1.msra.mxu0 %v328
        %959 = vmatprep.subr.mxu0 0.0
        %960 = vmatpush1.msra.mxu0 %v331
        %961 = vmatprep.subr.mxu0 0.0
        %962 = vmatpush1.msra.mxu0 %v334
        %963 = vmatprep.subr.mxu0 0.0
        %964 = vmatpush1.msra.mxu0 %v337
        %965 = vmatprep.subr.mxu0 0.0
        %966 = vmatpush1.msra.mxu0 %v340
        %967 = vmatprep.subr.mxu0 0.0
        %968 = vmatpush1.msra.mxu0 %v343
        %969 = vmatprep.subr.mxu0 0.0
        %970 = vmatpush1.msra.mxu0 %v346
        %971 = vmatprep.subr.mxu0 0.0
        %972 = vmatpush1.msra.mxu0 %v349
        %973 = vmatprep.subr.mxu0 0.0
        %974 = vmatpush1.msra.mxu0 %v352
        %975 = vmatprep.subr.mxu0 0.0
        %976 = vmatpush1.msra.mxu0 0.0
        %977 = vmatprep.subr.mxu0 0.0
        %978 = vmatpush1.msra.mxu0 0.0
        %979 = vmatprep.subr.mxu0 0.0
        %980 = vmatpush1.msra.mxu0 0.0
        %981 = vmatprep.subr.mxu0 0.0
        %982 = vmatpush1.msra.mxu0 0.0
        %983 = vmatprep.subr.mxu0 0.0
        %984 = vmatpush1.msra.mxu0 0.0
        %985 = vmatprep.subr.mxu0 0.0
        %986 = vmatpush1.msra.mxu0 0.0
        %987 = vmatprep.subr.mxu0 0.0
        %988 = vmatpush1.msra.mxu0 0.0
        %989 = vmatprep.subr.mxu0 0.0
        %990 = vmatpush1.msra.mxu0 0.0
        %991 = vmatprep.subr.mxu0 0.0
        %992 = vmatpush1.msra.mxu0 0.0
        %993 = vmatprep.subr.mxu0 0.0
        %994 = vmatpush1.msra.mxu0 0.0
        %995 = vmatprep.subr.mxu0 0.0
        %996 = vmatpush1.msra.mxu0 0.0
        %997 = vmatprep.subr.mxu0 0.0
        %998 = vmatpush1.msra.mxu0 0.0
        %999 = vmatprep.subr.mxu0 0.0
        %1000 = vmatpush1.msra.mxu0 0.0
        %1001 = vmatprep.subr.mxu0 0.0
        %1002 = vmatpush1.msra.mxu0 0.0
        %1003 = vmatprep.subr.mxu0 0.0
        %1004 = vmatpush1.msra.mxu0 0.0
        %1005 = vmatprep.subr.mxu0 0.0
        %1006 = vmatpush1.msra.mxu0 0.0
        %1007 = vmatprep.mubr.f32.mxu0 0.0
        %1008 = vmatmul.mubr.f32.gmra.mrb[0].mxu0 %v864
        %v1009 = vpop.f32.mrb[0].mxu0
        %v1010 = vadd.f32 0.0, %v1009
        %v1011 = vpop.f32.mrb[0].mxu0
        %1012 = vdwg.mxu0
        %v1013 = vadd.f32 %v869, %v939
        %v1014 = vadd.f32 %v870, %v941
        %v1015 = vadd.f32 %v871, %v1010
        %v1016 = vmul.f32 %v1013, 0.5
        %v1017 = vtanh.pop %v1016
        %v1018 = vadd.f32 %v1017, 1.0
        %v1019 = vmul.f32 %v1018, 0.5
        %v1020 = vmul.f32 %v1014, 0.5
        %v1021 = vtanh.pop %v1020
        %v1022 = vadd.f32 %v1021, 1.0
        %v1023 = vmul.f32 %v1022, 0.5
        %v1024 = vmul.f32 %v1019, %v1015
        %v1025 = vtanh.pop %v1024
        %v1026 = vsub.f32 %v1025, %v864
        %v1027 = vmul.f32 %v1023, %v1026
        %v1028 = vadd.f32 %v864, %v1027
        %s1029 = scalar_lea.vmem %s289, 24 [#allocation9]
        %1030 = vst [vmem:[%s1029] sm:$0xff] %v1028
        %p1031 = scmp.lt.s32.totalorder %s865, 20
        %s1032 = scalar_select %p1031, 1, 0
        %v1033 = vstv %s1032
        %vm1034 = vcmp.eq.s32.totalorder %v1033, 1
        %v1035 = vsel %vm1034, %v1028, %v864
        %s1036 = sadd.s32 %s354, 4
        %s1037 = scalar_lea.vmem %s249, 48 [#allocation3]
        %v1038 = vld [vmem:[%s1037] sm:$0xff]
        %v1039 = vld [vmem:[%s1037 + $0x8] sm:$0xf]
        %v1040 = vunpack.c.l.bf16 %v1038
        %v1041 = vunpack.c.h.bf16 %v1038
        %v1042 = vunpack.c.l.bf16 %v1039
        %1043 = vmatprep.subr.mxu0 %v306
        %1044 = vmatpush1.msra.mxu0 %v305
        %1045 = vmatprep.subr.mxu0 %v309
        %1046 = vmatpush1.msra.mxu0 %v308
        %1047 = vmatprep.subr.mxu0 %v312
        %1048 = vmatpush1.msra.mxu0 %v311
        %1049 = vmatprep.subr.mxu0 %v315
        %1050 = vmatpush1.msra.mxu0 %v314
        %1051 = vmatprep.subr.mxu0 %v318
        %1052 = vmatpush1.msra.mxu0 %v317
        %1053 = vmatprep.subr.mxu0 %v321
        %1054 = vmatpush1.msra.mxu0 %v320
        %1055 = vmatprep.subr.mxu0 %v324
        %1056 = vmatpush1.msra.mxu0 %v323
        %1057 = vmatprep.subr.mxu0 %v327
        %1058 = vmatpush1.msra.mxu0 %v326
        %1059 = vmatprep.subr.mxu0 %v330
        %1060 = vmatpush1.msra.mxu0 %v329
        %1061 = vmatprep.subr.mxu0 %v333
        %1062 = vmatpush1.msra.mxu0 %v332
        %1063 = vmatprep.subr.mxu0 %v336
        %1064 = vmatpush1.msra.mxu0 %v335
        %1065 = vmatprep.subr.mxu0 %v339
        %1066 = vmatpush1.msra.mxu0 %v338
        %1067 = vmatprep.subr.mxu0 %v342
        %1068 = vmatpush1.msra.mxu0 %v341
        %1069 = vmatprep.subr.mxu0 %v345
        %1070 = vmatpush1.msra.mxu0 %v344
        %1071 = vmatprep.subr.mxu0 %v348
        %1072 = vmatpush1.msra.mxu0 %v347
        %1073 = vmatprep.subr.mxu0 %v351
        %1074 = vmatpush1.msra.mxu0 %v350
        %1075 = vmatprep.subr.mxu0 0.0
        %1076 = vmatpush1.msra.mxu0 0.0
        %1077 = vmatprep.subr.mxu0 0.0
        %1078 = vmatpush1.msra.mxu0 0.0
        %1079 = vmatprep.subr.mxu0 0.0
        %1080 = vmatpush1.msra.mxu0 0.0
        %1081 = vmatprep.subr.mxu0 0.0
        %1082 = vmatpush1.msra.mxu0 0.0
        %1083 = vmatprep.subr.mxu0 0.0
        %1084 = vmatpush1.msra.mxu0 0.0
        %1085 = vmatprep.subr.mxu0 0.0
        %1086 = vmatpush1.msra.mxu0 0.0
        %1087 = vmatprep.subr.mxu0 0.0
        %1088 = vmatpush1.msra.mxu0 0.0
        %1089 = vmatprep.subr.mxu0 0.0
        %1090 = vmatpush1.msra.mxu0 0.0
        %1091 = vmatprep.subr.mxu0 0.0
        %1092 = vmatpush1.msra.mxu0 0.0
        %1093 = vmatprep.subr.mxu0 0.0
        %1094 = vmatpush1.msra.mxu0 0.0
        %1095 = vmatprep.subr.mxu0 0.0
        %1096 = vmatpush1.msra.mxu0 0.0
        %1097 = vmatprep.subr.mxu0 0.0
        %1098 = vmatpush1.msra.mxu0 0.0
        %1099 = vmatprep.subr.mxu0 0.0
        %1100 = vmatpush1.msra.mxu0 0.0
        %1101 = vmatprep.subr.mxu0 0.0
        %1102 = vmatpush1.msra.mxu0 0.0
        %1103 = vmatprep.subr.mxu0 0.0
        %1104 = vmatpush1.msra.mxu0 0.0
        %1105 = vmatprep.subr.mxu0 0.0
        %1106 = vmatpush1.msra.mxu0 0.0
        %1107 = vmatprep.mubr.f32.mxu0 0.0
        %1108 = vmatmul.mubr.f32.gmra.mrb[0].mxu0 %v1035
        %v1109 = vpop.f32.mrb[0].mxu0
        %v1110 = vadd.f32 0.0, %v1109
        %v1111 = vpop.f32.mrb[0].mxu0
        %v1112 = vadd.f32 0.0, %v1111
        %1113 = vdwg.mxu0
        %1114 = vmatprep.subr.mxu0 0.0
        %1115 = vmatpush1.msra.mxu0 %v307
        %1116 = vmatprep.subr.mxu0 0.0
        %1117 = vmatpush1.msra.mxu0 %v310
        %1118 = vmatprep.subr.mxu0 0.0
        %1119 = vmatpush1.msra.mxu0 %v313
        %1120 = vmatprep.subr.mxu0 0.0
        %1121 = vmatpush1.msra.mxu0 %v316
        %1122 = vmatprep.subr.mxu0 0.0
        %1123 = vmatpush1.msra.mxu0 %v319
        %1124 = vmatprep.subr.mxu0 0.0
        %1125 = vmatpush1.msra.mxu0 %v322
        %1126 = vmatprep.subr.mxu0 0.0
        %1127 = vmatpush1.msra.mxu0 %v325
        %1128 = vmatprep.subr.mxu0 0.0
        %1129 = vmatpush1.msra.mxu0 %v328
        %1130 = vmatprep.subr.mxu0 0.0
        %1131 = vmatpush1.msra.mxu0 %v331
        %1132 = vmatprep.subr.mxu0 0.0
        %1133 = vmatpush1.msra.mxu0 %v334
        %1134 = vmatprep.subr.mxu0 0.0
        %1135 = vmatpush1.msra.mxu0 %v337
        %1136 = vmatprep.subr.mxu0 0.0
        %1137 = vmatpush1.msra.mxu0 %v340
        %1138 = vmatprep.subr.mxu0 0.0
        %1139 = vmatpush1.msra.mxu0 %v343
        %1140 = vmatprep.subr.mxu0 0.0
        %1141 = vmatpush1.msra.mxu0 %v346
        %1142 = vmatprep.subr.mxu0 0.0
        %1143 = vmatpush1.msra.mxu0 %v349
        %1144 = vmatprep.subr.mxu0 0.0
        %1145 = vmatpush1.msra.mxu0 %v352
        %1146 = vmatprep.subr.mxu0 0.0
        %1147 = vmatpush1.msra.mxu0 0.0
        %1148 = vmatprep.subr.mxu0 0.0
        %1149 = vmatpush1.msra.mxu0 0.0
        %1150 = vmatprep.subr.mxu0 0.0
        %1151 = vmatpush1.msra.mxu0 0.0
        %1152 = vmatprep.subr.mxu0 0.0
        %1153 = vmatpush1.msra.mxu0 0.0
        %1154 = vmatprep.subr.mxu0 0.0
        %1155 = vmatpush1.msra.mxu0 0.0
        %1156 = vmatprep.subr.mxu0 0.0
        %1157 = vmatpush1.msra.mxu0 0.0
        %1158 = vmatprep.subr.mxu0 0.0
        %1159 = vmatpush1.msra.mxu0 0.0
        %1160 = vmatprep.subr.mxu0 0.0
        %1161 = vmatpush1.msra.mxu0 0.0
        %1162 = vmatprep.subr.mxu0 0.0
        %1163 = vmatpush1.msra.mxu0 0.0
        %1164 = vmatprep.subr.mxu0 0.0
        %1165 = vmatpush1.msra.mxu0 0.0
        %1166 = vmatprep.subr.mxu0 0.0
        %1167 = vmatpush1.msra.mxu0 0.0
        %1168 = vmatprep.subr.mxu0 0.0
        %1169 = vmatpush1.msra.mxu0 0.0
        %1170 = vmatprep.subr.mxu0 0.0
        %1171 = vmatpush1.msra.mxu0 0.0
        %1172 = vmatprep.subr.mxu0 0.0
        %1173 = vmatpush1.msra.mxu0 0.0
        %1174 = vmatprep.subr.mxu0 0.0
        %1175 = vmatpush1.msra.mxu0 0.0
        %1176 = vmatprep.subr.mxu0 0.0
        %1177 = vmatpush1.msra.mxu0 0.0
        %1178 = vmatprep.mubr.f32.mxu0 0.0
        %1179 = vmatmul.mubr.f32.gmra.mrb[0].mxu0 %v1035
        %v1180 = vpop.f32.mrb[0].mxu0
        %v1181 = vadd.f32 0.0, %v1180
        %v1182 = vpop.f32.mrb[0].mxu0
        %1183 = vdwg.mxu0
        %v1184 = vadd.f32 %v1040, %v1110
        %v1185 = vadd.f32 %v1041, %v1112
        %v1186 = vadd.f32 %v1042, %v1181
        %v1187 = vmul.f32 %v1184, 0.5
        %v1188 = vtanh.pop %v1187
        %v1189 = vadd.f32 %v1188, 1.0
        %v1190 = vmul.f32 %v1189, 0.5
        %v1191 = vmul.f32 %v1185, 0.5
        %v1192 = vtanh.pop %v1191
        %v1193 = vadd.f32 %v1192, 1.0
        %v1194 = vmul.f32 %v1193, 0.5
        %v1195 = vmul.f32 %v1190, %v1186
        %v1196 = vtanh.pop %v1195
        %v1197 = vsub.f32 %v1196, %v1035
        %v1198 = vmul.f32 %v1194, %v1197
        %v1199 = vadd.f32 %v1035, %v1198
        %s1200 = scalar_lea.vmem %s289, 32 [#allocation9]
        %1201 = vst [vmem:[%s1200] sm:$0xff] %v1199
        %p1202 = scmp.lt.s32.totalorder %s1036, 20
        %s1203 = scalar_select %p1202, 1, 0
        %v1204 = vstv %s1203
        %vm1205 = vcmp.eq.s32.totalorder %v1204, 1
        %v1206 = vsel %vm1205, %v1199, %v1035
        %s1207 = sadd.s32 %s354, 5
        %s1208 = scalar_lea.vmem %s249, 60 [#allocation3]
        %v1209 = vld [vmem:[%s1208] sm:$0xff]
        %v1210 = vld [vmem:[%s1208 + $0x8] sm:$0xf]
        %v1211 = vunpack.c.l.bf16 %v1209
        %v1212 = vunpack.c.h.bf16 %v1209
        %v1213 = vunpack.c.l.bf16 %v1210
        %1214 = vmatprep.subr.mxu0 %v306
        %1215 = vmatpush1.msra.mxu0 %v305
        %1216 = vmatprep.subr.mxu0 %v309
        %1217 = vmatpush1.msra.mxu0 %v308
        %1218 = vmatprep.subr.mxu0 %v312
        %1219 = vmatpush1.msra.mxu0 %v311
        %1220 = vmatprep.subr.mxu0 %v315
        %1221 = vmatpush1.msra.mxu0 %v314
        %1222 = vmatprep.subr.mxu0 %v318
        %1223 = vmatpush1.msra.mxu0 %v317
        %1224 = vmatprep.subr.mxu0 %v321
        %1225 = vmatpush1.msra.mxu0 %v320
        %1226 = vmatprep.subr.mxu0 %v324
        %1227 = vmatpush1.msra.mxu0 %v323
        %1228 = vmatprep.subr.mxu0 %v327
        %1229 = vmatpush1.msra.mxu0 %v326
        %1230 = vmatprep.subr.mxu0 %v330
        %1231 = vmatpush1.msra.mxu0 %v329
        %1232 = vmatprep.subr.mxu0 %v333
        %1233 = vmatpush1.msra.mxu0 %v332
        %1234 = vmatprep.subr.mxu0 %v336
        %1235 = vmatpush1.msra.mxu0 %v335
        %1236 = vmatprep.subr.mxu0 %v339
        %1237 = vmatpush1.msra.mxu0 %v338
        %1238 = vmatprep.subr.mxu0 %v342
        %1239 = vmatpush1.msra.mxu0 %v341
        %1240 = vmatprep.subr.mxu0 %v345
        %1241 = vmatpush1.msra.mxu0 %v344
        %1242 = vmatprep.subr.mxu0 %v348
        %1243 = vmatpush1.msra.mxu0 %v347
        %1244 = vmatprep.subr.mxu0 %v351
        %1245 = vmatpush1.msra.mxu0 %v350
        %1246 = vmatprep.subr.mxu0 0.0
        %1247 = vmatpush1.msra.mxu0 0.0
        %1248 = vmatprep.subr.mxu0 0.0
        %1249 = vmatpush1.msra.mxu0 0.0
        %1250 = vmatprep.subr.mxu0 0.0
        %1251 = vmatpush1.msra.mxu0 0.0
        %1252 = vmatprep.subr.mxu0 0.0
        %1253 = vmatpush1.msra.mxu0 0.0
        %1254 = vmatprep.subr.mxu0 0.0
        %1255 = vmatpush1.msra.mxu0 0.0
        %1256 = vmatprep.subr.mxu0 0.0
        %1257 = vmatpush1.msra.mxu0 0.0
        %1258 = vmatprep.subr.mxu0 0.0
        %1259 = vmatpush1.msra.mxu0 0.0
        %1260 = vmatprep.subr.mxu0 0.0
        %1261 = vmatpush1.msra.mxu0 0.0
        %1262 = vmatprep.subr.mxu0 0.0
        %1263 = vmatpush1.msra.mxu0 0.0
        %1264 = vmatprep.subr.mxu0 0.0
        %1265 = vmatpush1.msra.mxu0 0.0
        %1266 = vmatprep.subr.mxu0 0.0
        %1267 = vmatpush1.msra.mxu0 0.0
        %1268 = vmatprep.subr.mxu0 0.0
        %1269 = vmatpush1.msra.mxu0 0.0
        %1270 = vmatprep.subr.mxu0 0.0
        %1271 = vmatpush1.msra.mxu0 0.0
        %1272 = vmatprep.subr.mxu0 0.0
        %1273 = vmatpush1.msra.mxu0 0.0
        %1274 = vmatprep.subr.mxu0 0.0
        %1275 = vmatpush1.msra.mxu0 0.0
        %1276 = vmatprep.subr.mxu0 0.0
        %1277 = vmatpush1.msra.mxu0 0.0
        %1278 = vmatprep.mubr.f32.mxu0 0.0
        %1279 = vmatmul.mubr.f32.gmra.mrb[0].mxu0 %v1206
        %v1280 = vpop.f32.mrb[0].mxu0
        %v1281 = vadd.f32 0.0, %v1280
        %v1282 = vpop.f32.mrb[0].mxu0
        %v1283 = vadd.f32 0.0, %v1282
        %1284 = vdwg.mxu0
        %1285 = vmatprep.subr.mxu0 0.0
        %1286 = vmatpush1.msra.mxu0 %v307
        %1287 = vmatprep.subr.mxu0 0.0
        %1288 = vmatpush1.msra.mxu0 %v310
        %1289 = vmatprep.subr.mxu0 0.0
        %1290 = vmatpush1.msra.mxu0 %v313
        %1291 = vmatprep.subr.mxu0 0.0
        %1292 = vmatpush1.msra.mxu0 %v316
        %1293 = vmatprep.subr.mxu0 0.0
        %1294 = vmatpush1.msra.mxu0 %v319
        %1295 = vmatprep.subr.mxu0 0.0
        %1296 = vmatpush1.msra.mxu0 %v322
        %1297 = vmatprep.subr.mxu0 0.0
        %1298 = vmatpush1.msra.mxu0 %v325
        %1299 = vmatprep.subr.mxu0 0.0
        %1300 = vmatpush1.msra.mxu0 %v328
        %1301 = vmatprep.subr.mxu0 0.0
        %1302 = vmatpush1.msra.mxu0 %v331
        %1303 = vmatprep.subr.mxu0 0.0
        %1304 = vmatpush1.msra.mxu0 %v334
        %1305 = vmatprep.subr.mxu0 0.0
        %1306 = vmatpush1.msra.mxu0 %v337
        %1307 = vmatprep.subr.mxu0 0.0
        %1308 = vmatpush1.msra.mxu0 %v340
        %1309 = vmatprep.subr.mxu0 0.0
        %1310 = vmatpush1.msra.mxu0 %v343
        %1311 = vmatprep.subr.mxu0 0.0
        %1312 = vmatpush1.msra.mxu0 %v346
        %1313 = vmatprep.subr.mxu0 0.0
        %1314 = vmatpush1.msra.mxu0 %v349
        %1315 = vmatprep.subr.mxu0 0.0
        %1316 = vmatpush1.msra.mxu0 %v352
        %1317 = vmatprep.subr.mxu0 0.0
        %1318 = vmatpush1.msra.mxu0 0.0
        %1319 = vmatprep.subr.mxu0 0.0
        %1320 = vmatpush1.msra.mxu0 0.0
        %1321 = vmatprep.subr.mxu0 0.0
        %1322 = vmatpush1.msra.mxu0 0.0
        %1323 = vmatprep.subr.mxu0 0.0
        %1324 = vmatpush1.msra.mxu0 0.0
        %1325 = vmatprep.subr.mxu0 0.0
        %1326 = vmatpush1.msra.mxu0 0.0
        %1327 = vmatprep.subr.mxu0 0.0
        %1328 = vmatpush1.msra.mxu0 0.0
        %1329 = vmatprep.subr.mxu0 0.0
        %1330 = vmatpush1.msra.mxu0 0.0
        %1331 = vmatprep.subr.mxu0 0.0
        %1332 = vmatpush1.msra.mxu0 0.0
        %1333 = vmatprep.subr.mxu0 0.0
        %1334 = vmatpush1.msra.mxu0 0.0
        %1335 = vmatprep.subr.mxu0 0.0
        %1336 = vmatpush1.msra.mxu0 0.0
        %1337 = vmatprep.subr.mxu0 0.0
        %1338 = vmatpush1.msra.mxu0 0.0
        %1339 = vmatprep.subr.mxu0 0.0
        %1340 = vmatpush1.msra.mxu0 0.0
        %1341 = vmatprep.subr.mxu0 0.0
        %1342 = vmatpush1.msra.mxu0 0.0
        %1343 = vmatprep.subr.mxu0 0.0
        %1344 = vmatpush1.msra.mxu0 0.0
        %1345 = vmatprep.subr.mxu0 0.0
        %1346 = vmatpush1.msra.mxu0 0.0
        %1347 = vmatprep.subr.mxu0 0.0
        %1348 = vmatpush1.msra.mxu0 0.0
        %1349 = vmatprep.mubr.f32.mxu0 0.0
        %1350 = vmatmul.mubr.f32.gmra.mrb[0].mxu0 %v1206
        %v1351 = vpop.f32.mrb[0].mxu0
        %v1352 = vadd.f32 0.0, %v1351
        %v1353 = vpop.f32.mrb[0].mxu0
        %1354 = vdwg.mxu0
        %v1355 = vadd.f32 %v1211, %v1281
        %v1356 = vadd.f32 %v1212, %v1283
        %v1357 = vadd.f32 %v1213, %v1352
        %v1358 = vmul.f32 %v1355, 0.5
        %v1359 = vtanh.pop %v1358
        %v1360 = vadd.f32 %v1359, 1.0
        %v1361 = vmul.f32 %v1360, 0.5
        %v1362 = vmul.f32 %v1356, 0.5
        %v1363 = vtanh.pop %v1362
        %v1364 = vadd.f32 %v1363, 1.0
        %v1365 = vmul.f32 %v1364, 0.5
        %v1366 = vmul.f32 %v1361, %v1357
        %v1367 = vtanh.pop %v1366
        %v1368 = vsub.f32 %v1367, %v1206
        %v1369 = vmul.f32 %v1365, %v1368
        %v1370 = vadd.f32 %v1206, %v1369
        %s1371 = scalar_lea.vmem %s289, 40 [#allocation9]
        %1372 = vst [vmem:[%s1371] sm:$0xff] %v1370
        %p1373 = scmp.lt.s32.totalorder %s1207, 20
        %s1374 = scalar_select %p1373, 1, 0
        %v1375 = vstv %s1374
        %vm1376 = vcmp.eq.s32.totalorder %v1375, 1
        %v1377 = vsel %vm1376, %v1370, %v1206
        %s1378 = sadd.s32 %s354, 6
        %s1379 = scalar_lea.vmem %s249, 72 [#allocation3]
        %v1380 = vld [vmem:[%s1379] sm:$0xff]
        %v1381 = vld [vmem:[%s1379 + $0x8] sm:$0xf]
        %v1382 = vunpack.c.l.bf16 %v1380
        %v1383 = vunpack.c.h.bf16 %v1380
        %v1384 = vunpack.c.l.bf16 %v1381
        %1385 = vmatprep.subr.mxu0 %v306
        %1386 = vmatpush1.msra.mxu0 %v305
        %1387 = vmatprep.subr.mxu0 %v309
        %1388 = vmatpush1.msra.mxu0 %v308
        %1389 = vmatprep.subr.mxu0 %v312
        %1390 = vmatpush1.msra.mxu0 %v311
        %1391 = vmatprep.subr.mxu0 %v315
        %1392 = vmatpush1.msra.mxu0 %v314
        %1393 = vmatprep.subr.mxu0 %v318
        %1394 = vmatpush1.msra.mxu0 %v317
        %1395 = vmatprep.subr.mxu0 %v321
        %1396 = vmatpush1.msra.mxu0 %v320
        %1397 = vmatprep.subr.mxu0 %v324
        %1398 = vmatpush1.msra.mxu0 %v323
        %1399 = vmatprep.subr.mxu0 %v327
        %1400 = vmatpush1.msra.mxu0 %v326
        %1401 = vmatprep.subr.mxu0 %v330
        %1402 = vmatpush1.msra.mxu0 %v329
        %1403 = vmatprep.subr.mxu0 %v333
        %1404 = vmatpush1.msra.mxu0 %v332
        %1405 = vmatprep.subr.mxu0 %v336
        %1406 = vmatpush1.msra.mxu0 %v335
        %1407 = vmatprep.subr.mxu0 %v339
        %1408 = vmatpush1.msra.mxu0 %v338
        %1409 = vmatprep.subr.mxu0 %v342
        %1410 = vmatpush1.msra.mxu0 %v341
        %1411 = vmatprep.subr.mxu0 %v345
        %1412 = vmatpush1.msra.mxu0 %v344
        %1413 = vmatprep.subr.mxu0 %v348
        %1414 = vmatpush1.msra.mxu0 %v347
        %1415 = vmatprep.subr.mxu0 %v351
        %1416 = vmatpush1.msra.mxu0 %v350
        %1417 = vmatprep.subr.mxu0 0.0
        %1418 = vmatpush1.msra.mxu0 0.0
        %1419 = vmatprep.subr.mxu0 0.0
        %1420 = vmatpush1.msra.mxu0 0.0
        %1421 = vmatprep.subr.mxu0 0.0
        %1422 = vmatpush1.msra.mxu0 0.0
        %1423 = vmatprep.subr.mxu0 0.0
        %1424 = vmatpush1.msra.mxu0 0.0
        %1425 = vmatprep.subr.mxu0 0.0
        %1426 = vmatpush1.msra.mxu0 0.0
        %1427 = vmatprep.subr.mxu0 0.0
        %1428 = vmatpush1.msra.mxu0 0.0
        %1429 = vmatprep.subr.mxu0 0.0
        %1430 = vmatpush1.msra.mxu0 0.0
        %1431 = vmatprep.subr.mxu0 0.0
        %1432 = vmatpush1.msra.mxu0 0.0
        %1433 = vmatprep.subr.mxu0 0.0
        %1434 = vmatpush1.msra.mxu0 0.0
        %1435 = vmatprep.subr.mxu0 0.0
        %1436 = vmatpush1.msra.mxu0 0.0
        %1437 = vmatprep.subr.mxu0 0.0
        %1438 = vmatpush1.msra.mxu0 0.0
        %1439 = vmatprep.subr.mxu0 0.0
        %1440 = vmatpush1.msra.mxu0 0.0
        %1441 = vmatprep.subr.mxu0 0.0
        %1442 = vmatpush1.msra.mxu0 0.0
        %1443 = vmatprep.subr.mxu0 0.0
        %1444 = vmatpush1.msra.mxu0 0.0
        %1445 = vmatprep.subr.mxu0 0.0
        %1446 = vmatpush1.msra.mxu0 0.0
        %1447 = vmatprep.subr.mxu0 0.0
        %1448 = vmatpush1.msra.mxu0 0.0
        %1449 = vmatprep.mubr.f32.mxu0 0.0
        %1450 = vmatmul.mubr.f32.gmra.mrb[0].mxu0 %v1377
        %v1451 = vpop.f32.mrb[0].mxu0
        %v1452 = vadd.f32 0.0, %v1451
        %v1453 = vpop.f32.mrb[0].mxu0
        %v1454 = vadd.f32 0.0, %v1453
        %1455 = vdwg.mxu0
        %1456 = vmatprep.subr.mxu0 0.0
        %1457 = vmatpush1.msra.mxu0 %v307
        %1458 = vmatprep.subr.mxu0 0.0
        %1459 = vmatpush1.msra.mxu0 %v310
        %1460 = vmatprep.subr.mxu0 0.0
        %1461 = vmatpush1.msra.mxu0 %v313
        %1462 = vmatprep.subr.mxu0 0.0
        %1463 = vmatpush1.msra.mxu0 %v316
        %1464 = vmatprep.subr.mxu0 0.0
        %1465 = vmatpush1.msra.mxu0 %v319
        %1466 = vmatprep.subr.mxu0 0.0
        %1467 = vmatpush1.msra.mxu0 %v322
        %1468 = vmatprep.subr.mxu0 0.0
        %1469 = vmatpush1.msra.mxu0 %v325
        %1470 = vmatprep.subr.mxu0 0.0
        %1471 = vmatpush1.msra.mxu0 %v328
        %1472 = vmatprep.subr.mxu0 0.0
        %1473 = vmatpush1.msra.mxu0 %v331
        %1474 = vmatprep.subr.mxu0 0.0
        %1475 = vmatpush1.msra.mxu0 %v334
        %1476 = vmatprep.subr.mxu0 0.0
        %1477 = vmatpush1.msra.mxu0 %v337
        %1478 = vmatprep.subr.mxu0 0.0
        %1479 = vmatpush1.msra.mxu0 %v340
        %1480 = vmatprep.subr.mxu0 0.0
        %1481 = vmatpush1.msra.mxu0 %v343
        %1482 = vmatprep.subr.mxu0 0.0
        %1483 = vmatpush1.msra.mxu0 %v346
        %1484 = vmatprep.subr.mxu0 0.0
        %1485 = vmatpush1.msra.mxu0 %v349
        %1486 = vmatprep.subr.mxu0 0.0
        %1487 = vmatpush1.msra.mxu0 %v352
        %1488 = vmatprep.subr.mxu0 0.0
        %1489 = vmatpush1.msra.mxu0 0.0
        %1490 = vmatprep.subr.mxu0 0.0
        %1491 = vmatpush1.msra.mxu0 0.0
        %1492 = vmatprep.subr.mxu0 0.0
        %1493 = vmatpush1.msra.mxu0 0.0
        %1494 = vmatprep.subr.mxu0 0.0
        %1495 = vmatpush1.msra.mxu0 0.0
        %1496 = vmatprep.subr.mxu0 0.0
        %1497 = vmatpush1.msra.mxu0 0.0
        %1498 = vmatprep.subr.mxu0 0.0
        %1499 = vmatpush1.msra.mxu0 0.0
        %1500 = vmatprep.subr.mxu0 0.0
        %1501 = vmatpush1.msra.mxu0 0.0
        %1502 = vmatprep.subr.mxu0 0.0
        %1503 = vmatpush1.msra.mxu0 0.0
        %1504 = vmatprep.subr.mxu0 0.0
        %1505 = vmatpush1.msra.mxu0 0.0
        %1506 = vmatprep.subr.mxu0 0.0
        %1507 = vmatpush1.msra.mxu0 0.0
        %1508 = vmatprep.subr.mxu0 0.0
        %1509 = vmatpush1.msra.mxu0 0.0
        %1510 = vmatprep.subr.mxu0 0.0
        %1511 = vmatpush1.msra.mxu0 0.0
        %1512 = vmatprep.subr.mxu0 0.0
        %1513 = vmatpush1.msra.mxu0 0.0
        %1514 = vmatprep.subr.mxu0 0.0
        %1515 = vmatpush1.msra.mxu0 0.0
        %1516 = vmatprep.subr.mxu0 0.0
        %1517 = vmatpush1.msra.mxu0 0.0
        %1518 = vmatprep.subr.mxu0 0.0
        %1519 = vmatpush1.msra.mxu0 0.0
        %1520 = vmatprep.mubr.f32.mxu0 0.0
        %1521 = vmatmul.mubr.f32.gmra.mrb[0].mxu0 %v1377
        %v1522 = vpop.f32.mrb[0].mxu0
        %v1523 = vadd.f32 0.0, %v1522
        %v1524 = vpop.f32.mrb[0].mxu0
        %1525 = vdwg.mxu0
        %v1526 = vadd.f32 %v1382, %v1452
        %v1527 = vadd.f32 %v1383, %v1454
        %v1528 = vadd.f32 %v1384, %v1523
        %v1529 = vmul.f32 %v1526, 0.5
        %v1530 = vtanh.pop %v1529
        %v1531 = vadd.f32 %v1530, 1.0
        %v1532 = vmul.f32 %v1531, 0.5
        %v1533 = vmul.f32 %v1527, 0.5
        %v1534 = vtanh.pop %v1533
        %v1535 = vadd.f32 %v1534, 1.0
        %v1536 = vmul.f32 %v1535, 0.5
        %v1537 = vmul.f32 %v1532, %v1528
        %v1538 = vtanh.pop %v1537
        %v1539 = vsub.f32 %v1538, %v1377
        %v1540 = vmul.f32 %v1536, %v1539
        %v1541 = vadd.f32 %v1377, %v1540
        %s1542 = scalar_lea.vmem %s289, 48 [#allocation9]
        %1543 = vst [vmem:[%s1542] sm:$0xff] %v1541
        %p1544 = scmp.lt.s32.totalorder %s1378, 20
        %s1545 = scalar_select %p1544, 1, 0
        %v1546 = vstv %s1545
        %vm1547 = vcmp.eq.s32.totalorder %v1546, 1
        %v1548 = vsel %vm1547, %v1541, %v1377
        %s1549 = sadd.s32 %s354, 7
        %s1550 = scalar_lea.vmem %s249, 84 [#allocation3]
        %v1551 = vld [vmem:[%s1550] sm:$0xff]
        %v1552 = vld [vmem:[%s1550 + $0x8] sm:$0xf]
        %v1553 = vunpack.c.l.bf16 %v1551
        %v1554 = vunpack.c.h.bf16 %v1551
        %v1555 = vunpack.c.l.bf16 %v1552
        %1556 = vmatprep.subr.mxu0 %v306
        %1557 = vmatpush1.msra.mxu0 %v305
        %1558 = vmatprep.subr.mxu0 %v309
        %1559 = vmatpush1.msra.mxu0 %v308
        %1560 = vmatprep.subr.mxu0 %v312
        %1561 = vmatpush1.msra.mxu0 %v311
        %1562 = vmatprep.subr.mxu0 %v315
        %1563 = vmatpush1.msra.mxu0 %v314
        %1564 = vmatprep.subr.mxu0 %v318
        %1565 = vmatpush1.msra.mxu0 %v317
        %1566 = vmatprep.subr.mxu0 %v321
        %1567 = vmatpush1.msra.mxu0 %v320
        %1568 = vmatprep.subr.mxu0 %v324
        %1569 = vmatpush1.msra.mxu0 %v323
        %1570 = vmatprep.subr.mxu0 %v327
        %1571 = vmatpush1.msra.mxu0 %v326
        %1572 = vmatprep.subr.mxu0 %v330
        %1573 = vmatpush1.msra.mxu0 %v329
        %1574 = vmatprep.subr.mxu0 %v333
        %1575 = vmatpush1.msra.mxu0 %v332
        %1576 = vmatprep.subr.mxu0 %v336
        %1577 = vmatpush1.msra.mxu0 %v335
        %1578 = vmatprep.subr.mxu0 %v339
        %1579 = vmatpush1.msra.mxu0 %v338
        %1580 = vmatprep.subr.mxu0 %v342
        %1581 = vmatpush1.msra.mxu0 %v341
        %1582 = vmatprep.subr.mxu0 %v345
        %1583 = vmatpush1.msra.mxu0 %v344
        %1584 = vmatprep.subr.mxu0 %v348
        %1585 = vmatpush1.msra.mxu0 %v347
        %1586 = vmatprep.subr.mxu0 %v351
        %1587 = vmatpush1.msra.mxu0 %v350
        %1588 = vmatprep.subr.mxu0 0.0
        %1589 = vmatpush1.msra.mxu0 0.0
        %1590 = vmatprep.subr.mxu0 0.0
        %1591 = vmatpush1.msra.mxu0 0.0
        %1592 = vmatprep.subr.mxu0 0.0
        %1593 = vmatpush1.msra.mxu0 0.0
        %1594 = vmatprep.subr.mxu0 0.0
        %1595 = vmatpush1.msra.mxu0 0.0
        %1596 = vmatprep.subr.mxu0 0.0
        %1597 = vmatpush1.msra.mxu0 0.0
        %1598 = vmatprep.subr.mxu0 0.0
        %1599 = vmatpush1.msra.mxu0 0.0
        %1600 = vmatprep.subr.mxu0 0.0
        %1601 = vmatpush1.msra.mxu0 0.0
        %1602 = vmatprep.subr.mxu0 0.0
        %1603 = vmatpush1.msra.mxu0 0.0
        %1604 = vmatprep.subr.mxu0 0.0
        %1605 = vmatpush1.msra.mxu0 0.0
        %1606 = vmatprep.subr.mxu0 0.0
        %1607 = vmatpush1.msra.mxu0 0.0
        %1608 = vmatprep.subr.mxu0 0.0
        %1609 = vmatpush1.msra.mxu0 0.0
        %1610 = vmatprep.subr.mxu0 0.0
        %1611 = vmatpush1.msra.mxu0 0.0
        %1612 = vmatprep.subr.mxu0 0.0
        %1613 = vmatpush1.msra.mxu0 0.0
        %1614 = vmatprep.subr.mxu0 0.0
        %1615 = vmatpush1.msra.mxu0 0.0
        %1616 = vmatprep.subr.mxu0 0.0
        %1617 = vmatpush1.msra.mxu0 0.0
        %1618 = vmatprep.subr.mxu0 0.0
        %1619 = vmatpush1.msra.mxu0 0.0
        %1620 = vmatprep.mubr.f32.mxu0 0.0
        %1621 = vmatmul.mubr.f32.gmra.mrb[0].mxu0 %v1548
        %v1622 = vpop.f32.mrb[0].mxu0
        %v1623 = vadd.f32 0.0, %v1622
        %v1624 = vpop.f32.mrb[0].mxu0
        %v1625 = vadd.f32 0.0, %v1624
        %1626 = vdwg.mxu0
        %1627 = vmatprep.subr.mxu0 0.0
        %1628 = vmatpush1.msra.mxu0 %v307
        %1629 = vmatprep.subr.mxu0 0.0
        %1630 = vmatpush1.msra.mxu0 %v310
        %1631 = vmatprep.subr.mxu0 0.0
        %1632 = vmatpush1.msra.mxu0 %v313
        %1633 = vmatprep.subr.mxu0 0.0
        %1634 = vmatpush1.msra.mxu0 %v316
        %1635 = vmatprep.subr.mxu0 0.0
        %1636 = vmatpush1.msra.mxu0 %v319
        %1637 = vmatprep.subr.mxu0 0.0
        %1638 = vmatpush1.msra.mxu0 %v322
        %1639 = vmatprep.subr.mxu0 0.0
        %1640 = vmatpush1.msra.mxu0 %v325
        %1641 = vmatprep.subr.mxu0 0.0
        %1642 = vmatpush1.msra.mxu0 %v328
        %1643 = vmatprep.subr.mxu0 0.0
        %1644 = vmatpush1.msra.mxu0 %v331
        %1645 = vmatprep.subr.mxu0 0.0
        %1646 = vmatpush1.msra.mxu0 %v334
        %1647 = vmatprep.subr.mxu0 0.0
        %1648 = vmatpush1.msra.mxu0 %v337
        %1649 = vmatprep.subr.mxu0 0.0
        %1650 = vmatpush1.msra.mxu0 %v340
        %1651 = vmatprep.subr.mxu0 0.0
        %1652 = vmatpush1.msra.mxu0 %v343
        %1653 = vmatprep.subr.mxu0 0.0
        %1654 = vmatpush1.msra.mxu0 %v346
        %1655 = vmatprep.subr.mxu0 0.0
        %1656 = vmatpush1.msra.mxu0 %v349
        %1657 = vmatprep.subr.mxu0 0.0
        %1658 = vmatpush1.msra.mxu0 %v352
        %1659 = vmatprep.subr.mxu0 0.0
        %1660 = vmatpush1.msra.mxu0 0.0
        %1661 = vmatprep.subr.mxu0 0.0
        %1662 = vmatpush1.msra.mxu0 0.0
        %1663 = vmatprep.subr.mxu0 0.0
        %1664 = vmatpush1.msra.mxu0 0.0
        %1665 = vmatprep.subr.mxu0 0.0
        %1666 = vmatpush1.msra.mxu0 0.0
        %1667 = vmatprep.subr.mxu0 0.0
        %1668 = vmatpush1.msra.mxu0 0.0
        %1669 = vmatprep.subr.mxu0 0.0
        %1670 = vmatpush1.msra.mxu0 0.0
        %1671 = vmatprep.subr.mxu0 0.0
        %1672 = vmatpush1.msra.mxu0 0.0
        %1673 = vmatprep.subr.mxu0 0.0
        %1674 = vmatpush1.msra.mxu0 0.0
        %1675 = vmatprep.subr.mxu0 0.0
        %1676 = vmatpush1.msra.mxu0 0.0
        %1677 = vmatprep.subr.mxu0 0.0
        %1678 = vmatpush1.msra.mxu0 0.0
        %1679 = vmatprep.subr.mxu0 0.0
        %1680 = vmatpush1.msra.mxu0 0.0
        %1681 = vmatprep.subr.mxu0 0.0
        %1682 = vmatpush1.msra.mxu0 0.0
        %1683 = vmatprep.subr.mxu0 0.0
        %1684 = vmatpush1.msra.mxu0 0.0
        %1685 = vmatprep.subr.mxu0 0.0
        %1686 = vmatpush1.msra.mxu0 0.0
        %1687 = vmatprep.subr.mxu0 0.0
        %1688 = vmatpush1.msra.mxu0 0.0
        %1689 = vmatprep.subr.mxu0 0.0
        %1690 = vmatpush1.msra.mxu0 0.0
        %1691 = vmatprep.mubr.f32.mxu0 0.0
        %1692 = vmatmul.mubr.f32.gmra.mrb[0].mxu0 %v1548
        %v1693 = vpop.f32.mrb[0].mxu0
        %v1694 = vadd.f32 0.0, %v1693
        %v1695 = vpop.f32.mrb[0].mxu0
        %1696 = vdwg.mxu0
        %v1697 = vadd.f32 %v1553, %v1623
        %v1698 = vadd.f32 %v1554, %v1625
        %v1699 = vadd.f32 %v1555, %v1694
        %v1700 = vmul.f32 %v1697, 0.5
        %v1701 = vtanh.pop %v1700
        %v1702 = vadd.f32 %v1701, 1.0
        %v1703 = vmul.f32 %v1702, 0.5
        %v1704 = vmul.f32 %v1698, 0.5
        %v1705 = vtanh.pop %v1704
        %v1706 = vadd.f32 %v1705, 1.0
        %v1707 = vmul.f32 %v1706, 0.5
        %v1708 = vmul.f32 %v1703, %v1699
        %v1709 = vtanh.pop %v1708
        %v1710 = vsub.f32 %v1709, %v1548
        %v1711 = vmul.f32 %v1707, %v1710
        %v1712 = vadd.f32 %v1548, %v1711
        %s1713 = scalar_lea.vmem %s289, 56 [#allocation9]
        %1714 = vst [vmem:[%s1713] sm:$0xff] %v1712
        %p1715 = scmp.lt.s32.totalorder %s1549, 20
        %s1716 = scalar_select %p1715, 1, 0
        %v1717 = vstv %s1716
        %vm1718 = vcmp.eq.s32.totalorder %v1717, 1
        %v1719 = vsel %vm1718, %v1712, %v1548
        %1720 = vst [vmem:[#allocation2] sm:$0xff] %v1719
        %1721 = vst [vmem:[%s296] sm:$0xff] %v1719
        %s1722 = sand.u32 %s125, 1
        %s1723 = scalar_lea.sflag [#allocation5], %s1722
        %s1724 = sand.u32 %s125, 1
        %s1725 = smul.addr %s1724, 64
        %s1726 = scalar_lea.vmem [#allocation9], %s1725
        %s1727 = sand.u32 %s151, 1
        %s1728 = scalar_lea.sflag [#allocation11], %s1727
        %s1729 = sand.u32 %s151, 1
        %s1730 = smul.addr %s1729, 8
        %s1731 = scalar_lea.vmem [#allocation10], %s1730
        // Predicated region
        $region49: #{tpu_custom_call.1} parent=31 // pred_check
          %p1732 = pneg %p135
        $region50: #{tpu_custom_call.1} parent=31 // pred_check_branch
          %1734 = sbr.rel (%p1732) target = $region52
        $region51: #{tpu_custom_call.1} parent=31 // pred_region
          %s1735 = smul.u32 8, %s33
          %s1737 = ssub.s32 1024, 1024
          %1738 = vsyncadd %s1723, %s1737
          %s1739 = smul.addr %s1735, 2
          %s1740 = sadd.s32 %s32, %s1739
          %s1741 = smul.addr %s1740, 128
          %s1742 = scalar_lea.hbm %s3, %s1741
          %s1743 = sshll.u32 %s1726, 4
          %s1744 = int_to_ptr.vmem [resolvable:$true] %s1743
          %1749 = dma.vmem_to_hbm [thread:$0]  %s1744, 1024, %s1742, %s1723, 128, 256, 8
        $region52: #{tpu_custom_call.1} parent=31 // pred_fallthru
          _
        // Predicated region
        $region53: #{tpu_custom_call.1} parent=31 // pred_check
          %p1750 = pneg %p161
        $region54: #{tpu_custom_call.1} parent=31 // pred_check_branch
          %1752 = sbr.rel (%p1750) target = $region56
        $region55: #{tpu_custom_call.1} parent=31 // pred_region
          %s1754 = ssub.s32 128, 128
          %1755 = vsyncadd %s1728, %s1754
          %s1756 = smul.addr %s32, 128
          %s1757 = scalar_lea.hbm %s4, %s1756
          %s1759 = sshll.u32 %s1731, 4
          %s1760 = int_to_ptr.vmem [resolvable:$true] %s1759
          %1762 = dma.vmem_to_hbm [thread:$0]  %s1760, 128, %s1757, %s1728
        $region56: #{tpu_custom_call.1} parent=31 // pred_fallthru
          _
      $region32: #{tpu_custom_call.1} parent=5 // pred_fallthru
        _
      %p1763 = scmp.le.s32.totalorder 2, %s23
      // Predicated region
      $region57: #{tpu_custom_call.1} parent=5 // pred_check
        %p1764 = pneg %p1763
      $region58: #{tpu_custom_call.1} parent=5 // pred_check_branch
        %1766 = sbr.rel (%p1764) target = $region60
      $region59: #{tpu_custom_call.1} parent=5 // pred_region
        %s1767 = ssub.s32 %s23, 2
        // Predicated region
        $region61: #{tpu_custom_call.1} parent=59 // pred_check
          %p1768 = pneg %p141
        $region62: #{tpu_custom_call.1} parent=59 // pred_check_branch
          %1770 = sbr.rel (%p1768) target = $region64
        $region63: #{tpu_custom_call.1} parent=59 // pred_region
          %s1771 = sand.u32 %s126, 1
          %s1772 = scalar_lea.sflag [#allocation5], %s1771
          %s1773 = sand.u32 %s126, 1
          %s1774 = smul.addr %s1773, 64
          %s1775 = scalar_lea.vmem [#allocation9], %s1774
          %1776 = dma.done %s1772, 1024
        $region64: #{tpu_custom_call.1} parent=59 // pred_fallthru
          _
        // Predicated region
        $region65: #{tpu_custom_call.1} parent=59 // pred_check
          %p1777 = pneg %p167
        $region66: #{tpu_custom_call.1} parent=59 // pred_check_branch
          %1779 = sbr.rel (%p1777) target = $region68
        $region67: #{tpu_custom_call.1} parent=59 // pred_region
          %s1780 = sand.u32 %s152, 1
          %s1781 = scalar_lea.sflag [#allocation11], %s1780
          %s1782 = sand.u32 %s152, 1
          %s1783 = smul.addr %s1782, 8
          %s1784 = scalar_lea.vmem [#allocation10], %s1783
          %1785 = dma.done %s1781, 128
        $region68: #{tpu_custom_call.1} parent=59 // pred_fallthru
          _
      $region60: #{tpu_custom_call.1} parent=5 // pred_fallthru
        _
    $region6: #{tpu_custom_call.1} parent=1 // loop_footer
      %s27 = sadd.s32 1, %s23
    $region7: #{tpu_custom_call.1} parent=1 // loop_footer_branch
      %22 = sbr.rel target = $region3
    $region8: #{tpu_custom_call.1} parent=1 // loop_exit
      _
    %1786 = vsyncpa [#allocation4], 1
    %s1787 = scalar_lea.sflag [#allocation4], 1
    %1788 = vsyncpa %s1787, 1
    %1789 = vsyncpa [#allocation7], 1
    %s1790 = scalar_lea.sflag [#allocation7], 1
    %1791 = vsyncpa %s1790, 1
    %1792 = vsyncpa [#allocation5], 1
    %s1793 = scalar_lea.sflag [#allocation5], 1
    %1794 = vsyncpa %s1793, 1
    %1795 = vsyncpa [#allocation11], 1
    %s1796 = scalar_lea.sflag [#allocation11], 1
    %1797 = vsyncpa %s1796, 1

</llo_original>
